<compile_context>
chip_gen: v6e
topology: v6e:2x2x1
jax: 0.10.0
libtpu: 0.0.40
codegen_flags: <defaults>
</compile_context>

<pallas_src>
import functools
import math

import jax
import jax.numpy as jnp
from jax import lax
from jax.experimental import pallas as pl
from jax.experimental.pallas import tpu as pltpu


def _postnorm_ffn_kernel(x_ref, g_ref, bn_ref, w1_ref, b1_ref, w2_ref, b2_ref,
                         o_ref, *, eps, approximate_gelu):
    # x_ref: (dim, tl) tile of one batch element (channels x positions).
    x = x_ref[...].astype(jnp.float32)

    # LayerNorm over the channel axis (axis 0); biased variance matches
    # torch.var(..., unbiased=False).
    mean = jnp.mean(x, axis=0, keepdims=True)                    # (1, tl)
    var = jnp.mean((x - mean) ** 2, axis=0, keepdims=True)       # (1, tl)
    xn = (x - mean) * lax.rsqrt(var + jnp.float32(eps))          # EUP rsqrt
    xn = xn * g_ref[...].astype(jnp.float32) + bn_ref[...].astype(jnp.float32)

    # Pointwise conv #1: (hidden, dim) @ (dim, tl). Operands stay in the
    # parameter dtype (bf16-friendly); accumulation is f32 on the MXU.
    h = jnp.dot(w1_ref[...], xn.astype(w1_ref.dtype),
                preferred_element_type=jnp.float32)
    h = h + b1_ref[...].astype(jnp.float32)

    if approximate_gelu:
        # tanh approximation rides the otherwise-idle EUP slot (v6e/v7x).
        h = jax.nn.gelu(h, approximate=True)
    else:
        # Exact erf GELU: matches torch.nn.GELU() default.
        h = 0.5 * h * (1.0 + lax.erf(h * jnp.float32(1.0 / math.sqrt(2.0))))

    # Pointwise conv #2: (dim, hidden) @ (hidden, tl).
    o = jnp.dot(w2_ref[...], h.astype(w2_ref.dtype),
                preferred_element_type=jnp.float32)
    o = o + b2_ref[...].astype(jnp.float32)

    o_ref[...] = o.astype(o_ref.dtype)


def post_norm_feed_forward(x, g, b, w1, b1, w2, b2, *, eps=1e-5, tl=256,
                           approximate_gelu=False):
    """PostNorm(dim, FeedForward(dim, mult)) forward on NCW input.

    x:  (N, dim, L)                 activations (PyTorch Conv1d NCW layout)
    g:  (1, dim, 1) or (dim,)       LayerNorm gain
    b:  (1, dim, 1) or (dim,)       LayerNorm bias
    w1: (hidden, dim)               Conv1d(dim, hidden, 1) weight (k-dim squeezed)
    b1: (hidden,)
    w2: (dim, hidden)               Conv1d(hidden, dim, 1) weight (k-dim squeezed)
    b2: (dim,)
    """
    n, dim, length = x.shape
    hidden = w1.shape[0]
    assert w1.shape == (hidden, dim) and w2.shape == (dim, hidden)

    # Lane-dense length tile (multiple of 128); pad the length axis so the grid
    # covers it exactly (padded columns are sliced off at the end).
    tl = max(128, (int(tl) // 128) * 128)
    l_pad = pl.cdiv(length, tl) * tl
    if l_pad != length:
        x = jnp.pad(x, ((0, 0), (0, 0), (0, l_pad - length)))

    g2 = g.reshape(dim, 1)
    bn2 = b.reshape(dim, 1)
    b1_2 = b1.reshape(hidden, 1)
    b2_2 = b2.reshape(dim, 1)

    grid = (n, l_pad // tl)

    # VMEM budget: double-buffered weights + double-buffered in/out tiles +
    # f32 intermediates, with headroom; never below the scoped default.
    itemsize = jnp.dtype(x.dtype).itemsize
    w_bytes = 2 * (w1.size * w1.dtype.itemsize + w2.size * w2.dtype.itemsize)
    tile_bytes = 2 * 2 * dim * tl * itemsize
    inter_bytes = (hidden + dim) * tl * 4
    vmem_bytes = int(min(max(w_bytes + tile_bytes + inter_bytes + (8 << 20),
                             32 << 20), 64 << 20))

    flops = 4 * n * l_pad * dim * hidden            # two pointwise-conv matmuls
    bytes_accessed = (2 * n * dim * l_pad) * itemsize + w_bytes // 2
    cost = pl.CostEstimate(flops=flops,
                           transcendentals=n * l_pad * hidden,
                           bytes_accessed=bytes_accessed)

    kernel = functools.partial(_postnorm_ffn_kernel, eps=eps,
                               approximate_gelu=approximate_gelu)

    out = pl.pallas_call(
        kernel,
        out_shape=jax.ShapeDtypeStruct((n, dim, l_pad), x.dtype),
        grid_spec=pltpu.PrefetchScalarGridSpec(
            num_scalar_prefetch=0,
            grid=grid,
            in_specs=[
                pl.BlockSpec((pl.Squeezed(), dim, tl), lambda i, j: (i, 0, j)),
                pl.BlockSpec((dim, 1), lambda i, j: (0, 0)),
                pl.BlockSpec((dim, 1), lambda i, j: (0, 0)),
                pl.BlockSpec((hidden, dim), lambda i, j: (0, 0)),
                pl.BlockSpec((hidden, 1), lambda i, j: (0, 0)),
                pl.BlockSpec((dim, hidden), lambda i, j: (0, 0)),
                pl.BlockSpec((dim, 1), lambda i, j: (0, 0)),
            ],
            out_specs=pl.BlockSpec((pl.Squeezed(), dim, tl),
                                   lambda i, j: (i, 0, j)),
        ),
        compiler_params=pltpu.CompilerParams(
            dimension_semantics=("parallel", "parallel"),
            vmem_limit_bytes=vmem_bytes),
        cost_estimate=cost,
    )(x, g2, bn2, w1, b1_2, w2, b2_2)

    if l_pad != length:
        out = out[:, :, :length]
    return out


if __name__ == "__main__":
    key = jax.random.PRNGKey(0)
    kx, kg, kb, k1, k2, k3, k4 = jax.random.split(key, 7)

    # Small but lane-friendly shapes: 128 channels, 320 positions (exercises
    # the padded final length tile), hidden = dim * 4.
    batch, dim, length, mult = 2, 128, 320, 4
    hidden = dim * mult
    eps = 1e-5

    x = jax.random.normal(kx, (batch, dim, length), jnp.float32)

    # LayerNorm params (PyTorch stores them as (1, dim, 1)).
    g = 1.0 + 0.1 * jax.random.normal(kg, (1, dim, 1), jnp.float32)
    bnorm = 0.1 * jax.random.normal(kb, (1, dim, 1), jnp.float32)

    # Conv1d weights in native PyTorch (out_ch, in_ch) layout (kernel dim squeezed).
    bound1 = 1.0 / math.sqrt(dim)
    bound2 = 1.0 / math.sqrt(hidden)
    w1 = jax.random.uniform(k1, (hidden, dim), jnp.float32, -bound1, bound1)
    b1 = jax.random.uniform(k2, (hidden,), jnp.float32, -bound1, bound1)
    w2 = jax.random.uniform(k3, (dim, hidden), jnp.float32, -bound2, bound2)
    b2 = jax.random.uniform(k4, (dim,), jnp.float32, -bound2, bound2)

    out = post_norm_feed_forward(x, g, bnorm, w1, b1, w2, b2, eps=eps, tl=256)
    out = jax.block_until_ready(out)

    # Pure-JAX reference: channel-LayerNorm then pointwise-conv MLP (exact GELU).
    mean = jnp.mean(x, axis=1, keepdims=True)
    var = jnp.mean((x - mean) ** 2, axis=1, keepdims=True)
    xn = (x - mean) / jnp.sqrt(var + eps) * g + bnorm
    h_ref = jnp.einsum("oc,ncl->nol", w1, xn,
                       precision=lax.Precision.HIGHEST) + b1[None, :, None]
    h_ref = 0.5 * h_ref * (1.0 + lax.erf(h_ref / jnp.sqrt(2.0)))
    o_ref = jnp.einsum("co,nol->ncl", w2, h_ref,
                       precision=lax.Precision.HIGHEST) + b2[None, :, None]

    assert out.shape == (batch, dim, length)
    max_err = float(jnp.max(jnp.abs(out - o_ref)))
    assert jnp.allclose(out, o_ref, atol=2e-4, rtol=2e-4), max_err

    print("KERNEL_OK")
</pallas_src>

<mosaic_0001>
module attributes {stable_mosaic.version = 11 : i64} {
  func.func @_postnorm_ffn_kernel(%arg0: i32, %arg1: i32, %arg2: memref<1x128x256xf32, #tpu.memory_space<vmem>>, %arg3: memref<128x1xf32, #tpu.memory_space<vmem>>, %arg4: memref<128x1xf32, #tpu.memory_space<vmem>>, %arg5: memref<512x128xf32, #tpu.memory_space<vmem>>, %arg6: memref<512x1xf32, #tpu.memory_space<vmem>>, %arg7: memref<128x512xf32, #tpu.memory_space<vmem>>, %arg8: memref<128x1xf32, #tpu.memory_space<vmem>>, %arg9: memref<1x128x256xf32, #tpu.memory_space<vmem>>) attributes {dimension_semantics = [#tpu.dimension_semantics<parallel>, #tpu.dimension_semantics<parallel>], iteration_bounds = array<i64: 2, 2>, scalar_prefetch = 0 : i64, scratch_operands = 0 : i64, tpu.core_type = #tpu.core_type<tc>, window_params = [{transform_indices = @transform_0, window_bounds = array<i64: 1, 128, 256>}, {pipeline_mode = #tpu.pipeline_mode<synchronous>, transform_indices = @transform_1, window_bounds = array<i64: 128, 1>}, {pipeline_mode = #tpu.pipeline_mode<synchronous>, transform_indices = @transform_2, window_bounds = array<i64: 128, 1>}, {pipeline_mode = #tpu.pipeline_mode<synchronous>, transform_indices = @transform_3, window_bounds = array<i64: 512, 128>}, {pipeline_mode = #tpu.pipeline_mode<synchronous>, transform_indices = @transform_4, window_bounds = array<i64: 512, 1>}, {pipeline_mode = #tpu.pipeline_mode<synchronous>, transform_indices = @transform_5, window_bounds = array<i64: 128, 512>}, {pipeline_mode = #tpu.pipeline_mode<synchronous>, transform_indices = @transform_6, window_bounds = array<i64: 128, 1>}, {transform_indices = @transform_7, window_bounds = array<i64: 1, 128, 256>}]} {
    %c0 = arith.constant 0 : index
    %c0_0 = arith.constant 0 : index
    %c0_1 = arith.constant 0 : index
    %0 = vector.load %arg2[%c0, %c0_0, %c0_1] : memref<1x128x256xf32, #tpu.memory_space<vmem>>, vector<1x128x256xf32>
    %1 = vector.shape_cast %0 : vector<1x128x256xf32> to vector<128x256xf32>
    %cst = arith.constant dense<0.000000e+00> : vector<256xf32>
    %2 = vector.multi_reduction <add>, %1, %cst [0] : vector<128x256xf32> to vector<256xf32>
    %3 = vector.shape_cast %2 : vector<256xf32> to vector<1x256xf32>
    %cst_2 = arith.constant 1.280000e+02 : f32
    %4 = vector.broadcast %cst_2 : f32 to vector<1x256xf32>
    %5 = arith.divf %3, %4 : vector<1x256xf32>
    %6 = vector.broadcast %5 : vector<1x256xf32> to vector<128x256xf32>
    %7 = arith.subf %1, %6 : vector<128x256xf32>
    %8 = arith.mulf %7, %7 : vector<128x256xf32>
    %cst_3 = arith.constant dense<0.000000e+00> : vector<256xf32>
    %9 = vector.multi_reduction <add>, %8, %cst_3 [0] : vector<128x256xf32> to vector<256xf32>
    %10 = vector.shape_cast %9 : vector<256xf32> to vector<1x256xf32>
    %cst_4 = arith.constant 1.280000e+02 : f32
    %11 = vector.broadcast %cst_4 : f32 to vector<1x256xf32>
    %12 = arith.divf %10, %11 : vector<1x256xf32>
    %13 = vector.broadcast %5 : vector<1x256xf32> to vector<128x256xf32>
    %14 = arith.subf %1, %13 : vector<128x256xf32>
    %cst_5 = arith.constant 9.99999974E-6 : f32
    %15 = vector.broadcast %cst_5 : f32 to vector<1x256xf32>
    %16 = arith.addf %12, %15 : vector<1x256xf32>
    %17 = math.rsqrt %16 : vector<1x256xf32>
    %18 = vector.broadcast %17 : vector<1x256xf32> to vector<128x256xf32>
    %19 = arith.mulf %14, %18 : vector<128x256xf32>
    %c0_6 = arith.constant 0 : index
    %c0_7 = arith.constant 0 : index
    %20 = vector.load %arg3[%c0_6, %c0_7] : memref<128x1xf32, #tpu.memory_space<vmem>>, vector<128x1xf32>
    %21 = vector.broadcast %20 : vector<128x1xf32> to vector<128x256xf32>
    %22 = arith.mulf %19, %21 : vector<128x256xf32>
    %c0_8 = arith.constant 0 : index
    %c0_9 = arith.constant 0 : index
    %23 = vector.load %arg4[%c0_8, %c0_9] : memref<128x1xf32, #tpu.memory_space<vmem>>, vector<128x1xf32>
    %24 = vector.broadcast %23 : vector<128x1xf32> to vector<128x256xf32>
    %25 = arith.addf %22, %24 : vector<128x256xf32>
    %c0_10 = arith.constant 0 : index
    %c0_11 = arith.constant 0 : index
    %26 = vector.load %arg5[%c0_10, %c0_11] : memref<512x128xf32, #tpu.memory_space<vmem>>, vector<512x128xf32>
    %cst_12 = arith.constant dense<0.000000e+00> : vector<512x256xf32>
    %27 = tpu.matmul %26, %25, %cst_12 {dimension_numbers = #tpu.dot_dimension_numbers<[1], [0], [0], [1], [0, 0, 1, 1], [], []>} : vector<512x128xf32>, vector<128x256xf32>, vector<512x256xf32> -> vector<512x256xf32>
    %c0_13 = arith.constant 0 : index
    %c0_14 = arith.constant 0 : index
    %28 = vector.load %arg6[%c0_13, %c0_14] : memref<512x1xf32, #tpu.memory_space<vmem>>, vector<512x1xf32>
    %29 = vector.broadcast %28 : vector<512x1xf32> to vector<512x256xf32>
    %30 = arith.addf %27, %29 : vector<512x256xf32>
    %cst_15 = arith.constant 5.000000e-01 : f32
    %31 = vector.broadcast %cst_15 : f32 to vector<512x256xf32>
    %32 = arith.mulf %31, %30 : vector<512x256xf32>
    %cst_16 = arith.constant 0.707106769 : f32
    %33 = vector.broadcast %cst_16 : f32 to vector<512x256xf32>
    %34 = arith.mulf %30, %33 : vector<512x256xf32>
    %35 = math.erf %34 : vector<512x256xf32>
    %cst_17 = arith.constant 1.000000e+00 : f32
    %36 = vector.broadcast %cst_17 : f32 to vector<512x256xf32>
    %37 = arith.addf %36, %35 : vector<512x256xf32>
    %38 = arith.mulf %32, %37 : vector<512x256xf32>
    %c0_18 = arith.constant 0 : index
    %c0_19 = arith.constant 0 : index
    %39 = vector.load %arg7[%c0_18, %c0_19] : memref<128x512xf32, #tpu.memory_space<vmem>>, vector<128x512xf32>
    %cst_20 = arith.constant dense<0.000000e+00> : vector<128x256xf32>
    %40 = tpu.matmul %39, %38, %cst_20 {dimension_numbers = #tpu.dot_dimension_numbers<[1], [0], [0], [1], [0, 0, 1, 1], [], []>} : vector<128x512xf32>, vector<512x256xf32>, vector<128x256xf32> -> vector<128x256xf32>
    %c0_21 = arith.constant 0 : index
    %c0_22 = arith.constant 0 : index
    %41 = vector.load %arg8[%c0_21, %c0_22] : memref<128x1xf32, #tpu.memory_space<vmem>>, vector<128x1xf32>
    %42 = vector.broadcast %41 : vector<128x1xf32> to vector<128x256xf32>
    %43 = arith.addf %40, %42 : vector<128x256xf32>
    %c0_23 = arith.constant 0 : index
    %c0_24 = arith.constant 0 : index
    %c0_25 = arith.constant 0 : index
    %44 = vector.load %arg9[%c0_23, %c0_24, %c0_25] : memref<1x128x256xf32, #tpu.memory_space<vmem>>, vector<1x128x256xf32>
    %45 = vector.shape_cast %44 : vector<1x128x256xf32> to vector<128x256xf32>
    %46 = vector.shape_cast %43 : vector<128x256xf32> to vector<1x128x256xf32>
    tpu.vector_store %arg9[%c0_23, %c0_24, %c0_25], %46 {strides = array<i32>} : memref<1x128x256xf32, #tpu.memory_space<vmem>>, vector<1x128x256xf32>,
    return
  }
  func.func @transform_0(%arg0: i32, %arg1: i32) -> (i32, i32, i32) {
    %c0_i32 = arith.constant 0 : i32
    %c0_i32_0 = arith.constant 0 : i32
    return %arg0, %c0_i32, %arg1 : i32, i32, i32
  }
  func.func @transform_1(%arg0: i32, %arg1: i32) -> (i32, i32) {
    %c0_i32 = arith.constant 0 : i32
    %c0_i32_0 = arith.constant 0 : i32
    %c0_i32_1 = arith.constant 0 : i32
    return %c0_i32, %c0_i32_0 : i32, i32
  }
  func.func @transform_2(%arg0: i32, %arg1: i32) -> (i32, i32) {
    %c0_i32 = arith.constant 0 : i32
    %c0_i32_0 = arith.constant 0 : i32
    %c0_i32_1 = arith.constant 0 : i32
    return %c0_i32, %c0_i32_0 : i32, i32
  }
  func.func @transform_3(%arg0: i32, %arg1: i32) -> (i32, i32) {
    %c0_i32 = arith.constant 0 : i32
    %c0_i32_0 = arith.constant 0 : i32
    %c0_i32_1 = arith.constant 0 : i32
    return %c0_i32, %c0_i32_0 : i32, i32
  }
  func.func @transform_4(%arg0: i32, %arg1: i32) -> (i32, i32) {
    %c0_i32 = arith.constant 0 : i32
    %c0_i32_0 = arith.constant 0 : i32
    %c0_i32_1 = arith.constant 0 : i32
    return %c0_i32, %c0_i32_0 : i32, i32
  }
  func.func @transform_5(%arg0: i32, %arg1: i32) -> (i32, i32) {
    %c0_i32 = arith.constant 0 : i32
    %c0_i32_0 = arith.constant 0 : i32
    %c0_i32_1 = arith.constant 0 : i32
    return %c0_i32, %c0_i32_0 : i32, i32
  }
  func.func @transform_6(%arg0: i32, %arg1: i32) -> (i32, i32) {
    %c0_i32 = arith.constant 0 : i32
    %c0_i32_0 = arith.constant 0 : i32
    %c0_i32_1 = arith.constant 0 : i32
    return %c0_i32, %c0_i32_0 : i32, i32
  }
  func.func @transform_7(%arg0: i32, %arg1: i32) -> (i32, i32, i32) {
    %c0_i32 = arith.constant 0 : i32
    %c0_i32_0 = arith.constant 0 : i32
    return %arg0, %c0_i32, %arg1 : i32, i32, i32
  }
}

</mosaic_0001>

<llo_original>
// kernel: tpu_custom_call.1
$region0: #{tpu_custom_call.1}
  #allocation0 [shape = 'u32[]', space=smem, size = 0x4, offset = 0x4, fixed_abs, tag = 'smem constant byte address 0x4 - core index']
  #allocation1 [shape = 'u32[144,128]{1,0:T(1,128)}', space=vmem, size = 0x12000, scoped, tag = 'internal scratch']
  %s0 = inlined_call_operand.hbm [shape: f32[2,128,512], index: 0, kind: input, shape index: {}]
  %s1 = inlined_call_operand.vmem [shape: f32[128,1], index: 1, kind: input, shape index: {}]
  %s2 = inlined_call_operand.vmem [shape: f32[128,1], index: 2, kind: input, shape index: {}]
  %s3 = inlined_call_operand.vmem [shape: f32[512,128], index: 3, kind: input, shape index: {}]
  %s4 = inlined_call_operand.vmem [shape: f32[512,1], index: 4, kind: input, shape index: {}]
  %s5 = inlined_call_operand.hbm [shape: f32[128,512], index: 5, kind: input, shape index: {}]
  %s6 = inlined_call_operand.vmem [shape: f32[128,1], index: 6, kind: input, shape index: {}]
  %s7 = inlined_call_operand.hbm [shape: f32[2,128,512], index: 7, kind: output, shape index: {}]
  %s8 = sld [smem:[#allocation0]]
  $region69: #{tpu_custom_call.1} parent=0
    _
  %s10 = ssub.s32 1, %s8
  %s11 = scalar_select 0, %s10, %s8
  $region1: #{tpu_custom_call.1} parent=0
    #allocation2 [shape = 'u8[262144]{0}', space=vmem, size = 0x40000, scoped, tag = 'input window, operand 0']
    #allocation3 [shape = 's32[2]{0}', space=sflag, size = 0x8, scoped, tag = 'scoped memory for tpu_custom_call.1']
    #allocation4 [shape = 's32[2]{0}', space=sflag, size = 0x8, scoped, tag = 'scoped memory for tpu_custom_call.1']
    #allocation5 [shape = 'u8[262144]{0}', space=vmem, size = 0x40000, scoped, tag = 'input window, operand 5, single buffered']
    #allocation6 [shape = 's32[1]{0}', space=sflag, size = 0x4, scoped, tag = 'scoped memory for tpu_custom_call.1']
    #allocation7 [shape = 'u8[262144]{0}', space=vmem, size = 0x40000, scoped, tag = 'output window, operand 0']
    %12 = vsyncpa [#allocation3], 0
    %s13 = scalar_lea.sflag [#allocation3], 1
    %14 = vsyncpa %s13, 0
    %15 = vsyncpa [#allocation6], 0
    %16 = vsyncpa [#allocation4], 0
    %s17 = scalar_lea.sflag [#allocation4], 1
    %18 = vsyncpa %s17, 0
    loop: start=0, step=1, limit=6
    $region2: #{tpu_custom_call.1} parent=1 // loop_pre_header
      _
    $region3: #{tpu_custom_call.1} parent=1 // loop_header
      %s20 = sphi 0, %s24
      %p21 = scmp.ge.s32.totalorder %s20, 6
      %s27 = sphi 0, %s39
      %s28 = sphi 0, %s35
      %s29 = sphi 0, %s27
      %s30 = sphi 0, %s28
      %s31 = sphi 0, %s29
      %s32 = sphi 0, %s30
      %s44 = sphi 0, %s46
      %s47 = sphi 0, %s44
      %s48 = sphi 0, %s47
      %s64 = sphi 0, %s48
      %s68 = sphi 0, %s68
      %s70 = sphi 0, %s68
      %s71 = sphi 0, %s70
      %s85 = sphi 0, %s71
      %s89 = sphi 0, %s89
      %s91 = sphi 0, %s89
      %s92 = sphi 0, %s91
      %s106 = sphi 0, %s92
      %s110 = sphi 0, %s110
      %s112 = sphi 0, %s110
      %s113 = sphi 0, %s112
      %s127 = sphi 0, %s113
      %s131 = sphi 0, %s131
      %s133 = sphi 0, %s131
      %s134 = sphi 0, %s133
      %s148 = sphi 0, %s134
      %s152 = sphi 0, %s152
      %s154 = sphi 0, %s152
      %s155 = sphi 0, %s154
      %s169 = sphi 0, %s155
      %s173 = sphi 0, %s173
      %s175 = sphi 0, %s173
      %s176 = sphi 0, %s175
      %s190 = sphi 0, %s176
      %s198 = sphi 0, %s200
      %s201 = sphi 0, %s198
      %s202 = sphi 0, %s201
      %s218 = sphi 0, %s202
    $region4: #{tpu_custom_call.1} parent=1 // loop_header_branch
      %23 = sbr.rel (%p21) target = $region8
    $region5: #{tpu_custom_call.1} parent=1 // loop_body
      %s25 = ssub.s32 %s20, 1
      %s26 = ssub.s32 %s20, 2
      %s33 = sadd.s32 1, %s28
      %p34 = scmp.ge.s32.totalorder %s33, 2
      %s35 = scalar_select %p34, 0, %s33
      %s36 = sadd.s32 1, %s27
      %s37 = scalar_select %p34, %s36, %s27
      %p38 = scmp.ge.s32.totalorder %s37, 2
      %s39 = scalar_select %p38, 0, %s37
      %s40 = ssub.s32 %s27, %s39
      %s41 = ssub.s32 %s28, %s35
      %s42 = sor.u32 %s40, %s41
      %p43 = scmp.eq.s32.totalorder %s42, 0
      %s45 = sadd.s32 %s44, 1
      %s46 = scalar_select %p43, %s44, %s45
      %p49 = pneg %p43
      %p50 = scmp.eq.s32.totalorder %s20, 3
      %p51 = por %p49, %p50
      %p52 = scmp.ne.s32.totalorder %s44, %s47
      %p53 = scmp.eq.s32.totalorder %s20, 0
      %p54 = por %p52, %p53
      %p55 = scmp.ne.s32.totalorder %s44, %s47
      %p56 = scmp.eq.s32.totalorder %s25, 3
      %p57 = por %p55, %p56
      %p58 = scmp.ne.s32.totalorder %s47, %s48
      %p59 = scmp.eq.s32.totalorder %s25, 0
      %p60 = por %p58, %p59
      %p61 = scmp.ne.s32.totalorder %s47, %s48
      %p62 = scmp.eq.s32.totalorder %s26, 3
      %p63 = por %p61, %p62
      %p65 = scmp.ne.s32.totalorder %s48, %s64
      %p66 = scmp.eq.s32.totalorder %s26, 0
      %p67 = por %p65, %p66
      %s69 = sadd.s32 %s68, 1
      %p72 = scmp.eq.s32.totalorder %s20, 3
      %p73 = scmp.ne.s32.totalorder %s68, %s70
      %p74 = scmp.eq.s32.totalorder %s20, 0
      %p75 = por %p73, %p74
      %p76 = scmp.ne.s32.totalorder %s68, %s70
      %p77 = scmp.eq.s32.totalorder %s25, 3
      %p78 = por %p76, %p77
      %p79 = scmp.ne.s32.totalorder %s70, %s71
      %p80 = scmp.eq.s32.totalorder %s25, 0
      %p81 = por %p79, %p80
      %p82 = scmp.ne.s32.totalorder %s70, %s71
      %p83 = scmp.eq.s32.totalorder %s26, 3
      %p84 = por %p82, %p83
      %p86 = scmp.ne.s32.totalorder %s71, %s85
      %p87 = scmp.eq.s32.totalorder %s26, 0
      %p88 = por %p86, %p87
      %s90 = sadd.s32 %s89, 1
      %p93 = scmp.eq.s32.totalorder %s20, 3
      %p94 = scmp.ne.s32.totalorder %s89, %s91
      %p95 = scmp.eq.s32.totalorder %s20, 0
      %p96 = por %p94, %p95
      %p97 = scmp.ne.s32.totalorder %s89, %s91
      %p98 = scmp.eq.s32.totalorder %s25, 3
      %p99 = por %p97, %p98
      %p100 = scmp.ne.s32.totalorder %s91, %s92
      %p101 = scmp.eq.s32.totalorder %s25, 0
      %p102 = por %p100, %p101
      %p103 = scmp.ne.s32.totalorder %s91, %s92
      %p104 = scmp.eq.s32.totalorder %s26, 3
      %p105 = por %p103, %p104
      %p107 = scmp.ne.s32.totalorder %s92, %s106
      %p108 = scmp.eq.s32.totalorder %s26, 0
      %p109 = por %p107, %p108
      %s111 = sadd.s32 %s110, 1
      %p114 = scmp.eq.s32.totalorder %s20, 3
      %p115 = scmp.ne.s32.totalorder %s110, %s112
      %p116 = scmp.eq.s32.totalorder %s20, 0
      %p117 = por %p115, %p116
      %p118 = scmp.ne.s32.totalorder %s110, %s112
      %p119 = scmp.eq.s32.totalorder %s25, 3
      %p120 = por %p118, %p119
      %p121 = scmp.ne.s32.totalorder %s112, %s113
      %p122 = scmp.eq.s32.totalorder %s25, 0
      %p123 = por %p121, %p122
      %p124 = scmp.ne.s32.totalorder %s112, %s113
      %p125 = scmp.eq.s32.totalorder %s26, 3
      %p126 = por %p124, %p125
      %p128 = scmp.ne.s32.totalorder %s113, %s127
      %p129 = scmp.eq.s32.totalorder %s26, 0
      %p130 = por %p128, %p129
      %s132 = sadd.s32 %s131, 1
      %p135 = scmp.eq.s32.totalorder %s20, 3
      %p136 = scmp.ne.s32.totalorder %s131, %s133
      %p137 = scmp.eq.s32.totalorder %s20, 0
      %p138 = por %p136, %p137
      %p139 = scmp.ne.s32.totalorder %s131, %s133
      %p140 = scmp.eq.s32.totalorder %s25, 3
      %p141 = por %p139, %p140
      %p142 = scmp.ne.s32.totalorder %s133, %s134
      %p143 = scmp.eq.s32.totalorder %s25, 0
      %p144 = por %p142, %p143
      %p145 = scmp.ne.s32.totalorder %s133, %s134
      %p146 = scmp.eq.s32.totalorder %s26, 3
      %p147 = por %p145, %p146
      %p149 = scmp.ne.s32.totalorder %s134, %s148
      %p150 = scmp.eq.s32.totalorder %s26, 0
      %p151 = por %p149, %p150
      %s153 = sadd.s32 %s152, 1
      %p156 = scmp.eq.s32.totalorder %s20, 3
      %p157 = scmp.ne.s32.totalorder %s152, %s154
      %p158 = scmp.eq.s32.totalorder %s20, 0
      %p159 = por %p157, %p158
      %p160 = scmp.ne.s32.totalorder %s152, %s154
      %p161 = scmp.eq.s32.totalorder %s25, 3
      %p162 = por %p160, %p161
      %p163 = scmp.ne.s32.totalorder %s154, %s155
      %p164 = scmp.eq.s32.totalorder %s25, 0
      %p165 = por %p163, %p164
      %p166 = scmp.ne.s32.totalorder %s154, %s155
      %p167 = scmp.eq.s32.totalorder %s26, 3
      %p168 = por %p166, %p167
      %p170 = scmp.ne.s32.totalorder %s155, %s169
      %p171 = scmp.eq.s32.totalorder %s26, 0
      %p172 = por %p170, %p171
      %s174 = sadd.s32 %s173, 1
      %p177 = scmp.eq.s32.totalorder %s20, 3
      %p178 = scmp.ne.s32.totalorder %s173, %s175
      %p179 = scmp.eq.s32.totalorder %s20, 0
      %p180 = por %p178, %p179
      %p181 = scmp.ne.s32.totalorder %s173, %s175
      %p182 = scmp.eq.s32.totalorder %s25, 3
      %p183 = por %p181, %p182
      %p184 = scmp.ne.s32.totalorder %s175, %s176
      %p185 = scmp.eq.s32.totalorder %s25, 0
      %p186 = por %p184, %p185
      %p187 = scmp.ne.s32.totalorder %s175, %s176
      %p188 = scmp.eq.s32.totalorder %s26, 3
      %p189 = por %p187, %p188
      %p191 = scmp.ne.s32.totalorder %s176, %s190
      %p192 = scmp.eq.s32.totalorder %s26, 0
      %p193 = por %p191, %p192
      %s194 = ssub.s32 %s27, %s39
      %s195 = ssub.s32 %s28, %s35
      %s196 = sor.u32 %s194, %s195
      %p197 = scmp.eq.s32.totalorder %s196, 0
      %s199 = sadd.s32 %s198, 1
      %s200 = scalar_select %p197, %s198, %s199
      %p203 = pneg %p197
      %p204 = scmp.eq.s32.totalorder %s20, 3
      %p205 = por %p203, %p204
      %p206 = scmp.ne.s32.totalorder %s198, %s201
      %p207 = scmp.eq.s32.totalorder %s20, 0
      %p208 = por %p206, %p207
      %p209 = scmp.ne.s32.totalorder %s198, %s201
      %p210 = scmp.eq.s32.totalorder %s25, 3
      %p211 = por %p209, %p210
      %p212 = scmp.ne.s32.totalorder %s201, %s202
      %p213 = scmp.eq.s32.totalorder %s25, 0
      %p214 = por %p212, %p213
      %p215 = scmp.ne.s32.totalorder %s201, %s202
      %p216 = scmp.eq.s32.totalorder %s26, 3
      %p217 = por %p215, %p216
      %p219 = scmp.ne.s32.totalorder %s202, %s218
      %p220 = scmp.eq.s32.totalorder %s26, 0
      %p221 = por %p219, %p220
      %p222 = scmp.le.s32.totalorder 1, %s20
      %p223 = scmp.lt.s32.totalorder %s20, 5
      %p224 = pnand %p222, %p223
      %p225 = pneg %p224
      // Predicated region
      $region9: #{tpu_custom_call.1} parent=5 // pred_check
        _
      $region10: #{tpu_custom_call.1} parent=5 // pred_check_branch
        %227 = sbr.rel (%p224) target = $region12
      $region11: #{tpu_custom_call.1} parent=5 // pred_region
        %s228 = ssub.s32 %s20, 1
        // Predicated region
        $region13: #{tpu_custom_call.1} parent=11 // pred_check
          %p229 = pneg %p81
        $region14: #{tpu_custom_call.1} parent=11 // pred_check_branch
          %231 = sbr.rel (%p229) target = $region16
        $region15: #{tpu_custom_call.1} parent=11 // pred_region
          _
        $region16: #{tpu_custom_call.1} parent=11 // pred_fallthru
          _
        // Predicated region
        $region17: #{tpu_custom_call.1} parent=11 // pred_check
          %p232 = pneg %p102
        $region18: #{tpu_custom_call.1} parent=11 // pred_check_branch
          %234 = sbr.rel (%p232) target = $region20
        $region19: #{tpu_custom_call.1} parent=11 // pred_region
          _
        $region20: #{tpu_custom_call.1} parent=11 // pred_fallthru
          _
        // Predicated region
        $region21: #{tpu_custom_call.1} parent=11 // pred_check
          %p235 = pneg %p123
        $region22: #{tpu_custom_call.1} parent=11 // pred_check_branch
          %237 = sbr.rel (%p235) target = $region24
        $region23: #{tpu_custom_call.1} parent=11 // pred_region
          _
        $region24: #{tpu_custom_call.1} parent=11 // pred_fallthru
          _
        // Predicated region
        $region25: #{tpu_custom_call.1} parent=11 // pred_check
          %p238 = pneg %p144
        $region26: #{tpu_custom_call.1} parent=11 // pred_check_branch
          %240 = sbr.rel (%p238) target = $region28
        $region27: #{tpu_custom_call.1} parent=11 // pred_region
          _
        $region28: #{tpu_custom_call.1} parent=11 // pred_fallthru
          _
        // Predicated region
        $region29: #{tpu_custom_call.1} parent=11 // pred_check
          %p241 = pneg %p165
        $region30: #{tpu_custom_call.1} parent=11 // pred_check_branch
          %243 = sbr.rel (%p241) target = $region32
        $region31: #{tpu_custom_call.1} parent=11 // pred_region
          %s245 = ssub.s32 8192, 8192
          %246 = vsyncadd [#allocation6], %s245
          %s247 = sshll.u32 [#allocation5], 4
          %s248 = int_to_ptr.vmem [resolvable:$true] %s247
          %253 = dma.hbm_to_vmem [thread:$0]  %s5, 8192, %s248, [#allocation6], 512, 512, 32
        $region32: #{tpu_custom_call.1} parent=11 // pred_fallthru
          _
        // Predicated region
        $region33: #{tpu_custom_call.1} parent=11 // pred_check
          %p254 = pneg %p186
        $region34: #{tpu_custom_call.1} parent=11 // pred_check_branch
          %256 = sbr.rel (%p254) target = $region36
        $region35: #{tpu_custom_call.1} parent=11 // pred_region
          _
        $region36: #{tpu_custom_call.1} parent=11 // pred_fallthru
          _
      $region12: #{tpu_custom_call.1} parent=5 // pred_fallthru
        _
      %p257 = scmp.lt.s32.totalorder %s20, 4
      // Predicated region
      $region37: #{tpu_custom_call.1} parent=5 // pred_check
        %p258 = pneg %p257
      $region38: #{tpu_custom_call.1} parent=5 // pred_check_branch
        %260 = sbr.rel (%p258) target = $region40
      $region39: #{tpu_custom_call.1} parent=5 // pred_region
        // Predicated region
        $region41: #{tpu_custom_call.1} parent=39 // pred_check
          %p261 = pneg %p54
        $region42: #{tpu_custom_call.1} parent=39 // pred_check_branch
          %263 = sbr.rel (%p261) target = $region44
        $region43: #{tpu_custom_call.1} parent=39 // pred_region
          %s264 = sand.u32 %s44, 1
          %s265 = scalar_lea.sflag [#allocation3], %s264
          %s266 = sand.u32 %s44, 1
          %s267 = smul.addr %s266, 256
          %s268 = scalar_lea.vmem [#allocation2], %s267
          %s269 = smul.u32 2, %s28
          %s271 = ssub.s32 4096, 4096
          %272 = vsyncadd %s265, %s271
          %s273 = smul.addr %s27, 64
          %s274 = sadd.s32 %s269, %s273
          %s275 = smul.addr %s274, 128
          %s276 = scalar_lea.hbm %s0, %s275
          %s277 = sshll.u32 %s268, 4
          %s278 = int_to_ptr.vmem [resolvable:$true] %s277
          %283 = dma.hbm_to_vmem [thread:$0]  %s276, 4096, %s278, %s265, 512, 256, 16
        $region44: #{tpu_custom_call.1} parent=39 // pred_fallthru
          _
      $region40: #{tpu_custom_call.1} parent=5 // pred_fallthru
        _
      %p284 = scmp.le.s32.totalorder 1, %s20
      %p285 = scmp.lt.s32.totalorder %s20, 5
      %p286 = pnand %p284, %p285
      %p287 = pneg %p286
      // Predicated region
      $region45: #{tpu_custom_call.1} parent=5 // pred_check
        _
      $region46: #{tpu_custom_call.1} parent=5 // pred_check_branch
        %289 = sbr.rel (%p286) target = $region48
      $region47: #{tpu_custom_call.1} parent=5 // pred_region
        %s290 = ssub.s32 %s20, 1
        %s291 = sand.u32 %s47, 1
        %s292 = scalar_lea.sflag [#allocation3], %s291
        %s293 = sand.u32 %s47, 1
        %s294 = smul.addr %s293, 256
        %s295 = scalar_lea.vmem [#allocation2], %s294
        // Predicated region
        $region49: #{tpu_custom_call.1} parent=47 // pred_check
          %p296 = pneg %p60
        $region50: #{tpu_custom_call.1} parent=47 // pred_check_branch
          %298 = sbr.rel (%p296) target = $region52
        $region51: #{tpu_custom_call.1} parent=47 // pred_region
          %299 = dma.done %s292, 4096
        $region52: #{tpu_custom_call.1} parent=47 // pred_fallthru
          _
        // Predicated region
        $region53: #{tpu_custom_call.1} parent=47 // pred_check
          %p300 = pneg %p165
        $region54: #{tpu_custom_call.1} parent=47 // pred_check_branch
          %302 = sbr.rel (%p300) target = $region56
        $region55: #{tpu_custom_call.1} parent=47 // pred_region
          %303 = dma.done [#allocation6], 8192
        $region56: #{tpu_custom_call.1} parent=47 // pred_fallthru
          _
        %s304 = sand.u32 %s47, 1
        %s305 = scalar_lea.sflag [#allocation3], %s304
        %s306 = sand.u32 %s47, 1
        %s307 = smul.addr %s306, 256
        %s308 = scalar_lea.vmem [#allocation2], %s307
        %p309 = pneg %p60
        %p310 = pneg %p57
        %p311 = pneg %p81
        %p312 = pneg %p78
        %p313 = pneg %p102
        %p314 = pneg %p99
        %p315 = pneg %p123
        %p316 = pneg %p120
        %p317 = pneg %p144
        %p318 = pneg %p141
        %p319 = pneg %p165
        %p320 = pneg %p162
        %p321 = pneg %p186
        %p322 = pneg %p183
        %p323 = pneg %p214
        %p324 = pneg %p211
        %s325 = sand.u32 %s201, 1
        %s326 = scalar_lea.sflag [#allocation4], %s325
        %s327 = sand.u32 %s201, 1
        %s328 = smul.addr %s327, 256
        %s329 = scalar_lea.vmem [#allocation7], %s328
        %s330 = smul.u32 2, %s30
        %s331 = smul.u32 2, %s30
        %v332 = vld [vmem:[%s295] sm:$0xff]
        %v333 = vld [vmem:[%s295 + $0x8] sm:$0xff]
        %v334 = vld [vmem:[%s295 + $0x10] sm:$0xff]
        %v335 = vld [vmem:[%s295 + $0x18] sm:$0xff]
        %v336 = vld [vmem:[%s295 + $0x20] sm:$0xff]
        %v337 = vld [vmem:[%s295 + $0x28] sm:$0xff]
        %v338 = vld [vmem:[%s295 + $0x30] sm:$0xff]
        %v339 = vld [vmem:[%s295 + $0x38] sm:$0xff]
        %v340 = vld [vmem:[%s295 + $0x40] sm:$0xff]
        %v341 = vld [vmem:[%s295 + $0x48] sm:$0xff]
        %v342 = vld [vmem:[%s295 + $0x50] sm:$0xff]
        %v343 = vld [vmem:[%s295 + $0x58] sm:$0xff]
        %v344 = vld [vmem:[%s295 + $0x60] sm:$0xff]
        %v345 = vld [vmem:[%s295 + $0x68] sm:$0xff]
        %v346 = vld [vmem:[%s295 + $0x70] sm:$0xff]
        %v347 = vld [vmem:[%s295 + $0x78] sm:$0xff]
        %v348 = vld [vmem:[%s295 + $0x80] sm:$0xff]
        %v349 = vld [vmem:[%s295 + $0x88] sm:$0xff]
        %v350 = vld [vmem:[%s295 + $0x90] sm:$0xff]
        %v351 = vld [vmem:[%s295 + $0x98] sm:$0xff]
        %v352 = vld [vmem:[%s295 + $0xa0] sm:$0xff]
        %v353 = vld [vmem:[%s295 + $0xa8] sm:$0xff]
        %v354 = vld [vmem:[%s295 + $0xb0] sm:$0xff]
        %v355 = vld [vmem:[%s295 + $0xb8] sm:$0xff]
        %v356 = vld [vmem:[%s295 + $0xc0] sm:$0xff]
        %v357 = vld [vmem:[%s295 + $0xc8] sm:$0xff]
        %v358 = vld [vmem:[%s295 + $0xd0] sm:$0xff]
        %v359 = vld [vmem:[%s295 + $0xd8] sm:$0xff]
        %v360 = vld [vmem:[%s295 + $0xe0] sm:$0xff]
        %v361 = vld [vmem:[%s295 + $0xe8] sm:$0xff]
        %v362 = vld [vmem:[%s295 + $0xf0] sm:$0xff]
        %v363 = vld [vmem:[%s295 + $0xf8] sm:$0xff]
        %v364 = vadd.f32 %v332, %v334
        %v365 = vadd.f32 %v364, %v336
        %v366 = vadd.f32 %v365, %v338
        %v367 = vadd.f32 %v366, %v340
        %v368 = vadd.f32 %v367, %v342
        %v369 = vadd.f32 %v368, %v344
        %v370 = vadd.f32 %v369, %v346
        %v371 = vadd.f32 %v370, %v348
        %v372 = vadd.f32 %v371, %v350
        %v373 = vadd.f32 %v372, %v352
        %v374 = vadd.f32 %v373, %v354
        %v375 = vadd.f32 %v374, %v356
        %v376 = vadd.f32 %v375, %v358
        %v377 = vadd.f32 %v376, %v360
        %v378 = vadd.f32 %v377, %v362
        %v379 = vrot.slane %v378, 4
        %v380 = vadd.f32 %v378, %v379
        %v381 = vrot.slane %v380, 2
        %v382 = vadd.f32 %v380, %v381
        %v383 = vrot.slane %v382, 1
        %v384 = vadd.f32 %v382, %v383
        %v385 = vadd.f32 %v333, %v335
        %v386 = vadd.f32 %v385, %v337
        %v387 = vadd.f32 %v386, %v339
        %v388 = vadd.f32 %v387, %v341
        %v389 = vadd.f32 %v388, %v343
        %v390 = vadd.f32 %v389, %v345
        %v391 = vadd.f32 %v390, %v347
        %v392 = vadd.f32 %v391, %v349
        %v393 = vadd.f32 %v392, %v351
        %v394 = vadd.f32 %v393, %v353
        %v395 = vadd.f32 %v394, %v355
        %v396 = vadd.f32 %v395, %v357
        %v397 = vadd.f32 %v396, %v359
        %v398 = vadd.f32 %v397, %v361
        %v399 = vadd.f32 %v398, %v363
        %v400 = vrot.slane %v399, 4
        %v401 = vadd.f32 %v399, %v400
        %v402 = vrot.slane %v401, 2
        %v403 = vadd.f32 %v401, %v402
        %v404 = vrot.slane %v403, 1
        %v405 = vadd.f32 %v403, %v404
        %v406 = vrcp.pop 128.0
        %v407 = vmul.f32 %v384, %v406
        %v408 = vmul.f32 %v405, %v406
        %v409 = vsub.f32 %v332, %v407
        %v410 = vsub.f32 %v333, %v408
        %v411 = vsub.f32 %v334, %v407
        %v412 = vsub.f32 %v335, %v408
        %v413 = vsub.f32 %v336, %v407
        %v414 = vsub.f32 %v337, %v408
        %v415 = vsub.f32 %v338, %v407
        %v416 = vsub.f32 %v339, %v408
        %v417 = vsub.f32 %v340, %v407
        %v418 = vsub.f32 %v341, %v408
        %v419 = vsub.f32 %v342, %v407
        %v420 = vsub.f32 %v343, %v408
        %v421 = vsub.f32 %v344, %v407
        %v422 = vsub.f32 %v345, %v408
        %v423 = vsub.f32 %v346, %v407
        %v424 = vsub.f32 %v347, %v408
        %v425 = vsub.f32 %v348, %v407
        %v426 = vsub.f32 %v349, %v408
        %v427 = vsub.f32 %v350, %v407
        %v428 = vsub.f32 %v351, %v408
        %v429 = vsub.f32 %v352, %v407
        %v430 = vsub.f32 %v353, %v408
        %v431 = vsub.f32 %v354, %v407
        %v432 = vsub.f32 %v355, %v408
        %v433 = vsub.f32 %v356, %v407
        %v434 = vsub.f32 %v357, %v408
        %v435 = vsub.f32 %v358, %v407
        %v436 = vsub.f32 %v359, %v408
        %v437 = vsub.f32 %v360, %v407
        %v438 = vsub.f32 %v361, %v408
        %v439 = vsub.f32 %v362, %v407
        %v440 = vsub.f32 %v363, %v408
        %v441 = vmul.f32 %v409, %v409
        %v442 = vmul.f32 %v410, %v410
        %v443 = vmul.f32 %v411, %v411
        %v444 = vmul.f32 %v412, %v412
        %v445 = vmul.f32 %v413, %v413
        %v446 = vmul.f32 %v414, %v414
        %v447 = vmul.f32 %v415, %v415
        %v448 = vmul.f32 %v416, %v416
        %v449 = vmul.f32 %v417, %v417
        %v450 = vmul.f32 %v418, %v418
        %v451 = vmul.f32 %v419, %v419
        %v452 = vmul.f32 %v420, %v420
        %v453 = vmul.f32 %v421, %v421
        %v454 = vmul.f32 %v422, %v422
        %v455 = vmul.f32 %v423, %v423
        %v456 = vmul.f32 %v424, %v424
        %v457 = vmul.f32 %v425, %v425
        %v458 = vmul.f32 %v426, %v426
        %v459 = vmul.f32 %v427, %v427
        %v460 = vmul.f32 %v428, %v428
        %v461 = vmul.f32 %v429, %v429
        %v462 = vmul.f32 %v430, %v430
        %v463 = vmul.f32 %v431, %v431
        %v464 = vmul.f32 %v432, %v432
        %v465 = vmul.f32 %v433, %v433
        %v466 = vmul.f32 %v434, %v434
        %v467 = vmul.f32 %v435, %v435
        %v468 = vmul.f32 %v436, %v436
        %v469 = vmul.f32 %v437, %v437
        %v470 = vmul.f32 %v438, %v438
        %v471 = vmul.f32 %v439, %v439
        %v472 = vmul.f32 %v440, %v440
        %v473 = vadd.f32 %v441, %v443
        %v474 = vadd.f32 %v473, %v445
        %v475 = vadd.f32 %v474, %v447
        %v476 = vadd.f32 %v475, %v449
        %v477 = vadd.f32 %v476, %v451
        %v478 = vadd.f32 %v477, %v453
        %v479 = vadd.f32 %v478, %v455
        %v480 = vadd.f32 %v479, %v457
        %v481 = vadd.f32 %v480, %v459
        %v482 = vadd.f32 %v481, %v461
        %v483 = vadd.f32 %v482, %v463
        %v484 = vadd.f32 %v483, %v465
        %v485 = vadd.f32 %v484, %v467
        %v486 = vadd.f32 %v485, %v469
        %v487 = vadd.f32 %v486, %v471
        %v488 = vrot.slane %v487, 4
        %v489 = vadd.f32 %v487, %v488
        %v490 = vrot.slane %v489, 2
        %v491 = vadd.f32 %v489, %v490
        %v492 = vrot.slane %v491, 1
        %v493 = vadd.f32 %v491, %v492
        %v494 = vadd.f32 %v442, %v444
        %v495 = vadd.f32 %v494, %v446
        %v496 = vadd.f32 %v495, %v448
        %v497 = vadd.f32 %v496, %v450
        %v498 = vadd.f32 %v497, %v452
        %v499 = vadd.f32 %v498, %v454
        %v500 = vadd.f32 %v499, %v456
        %v501 = vadd.f32 %v500, %v458
        %v502 = vadd.f32 %v501, %v460
        %v503 = vadd.f32 %v502, %v462
        %v504 = vadd.f32 %v503, %v464
        %v505 = vadd.f32 %v504, %v466
        %v506 = vadd.f32 %v505, %v468
        %v507 = vadd.f32 %v506, %v470
        %v508 = vadd.f32 %v507, %v472
        %v509 = vrot.slane %v508, 4
        %v510 = vadd.f32 %v508, %v509
        %v511 = vrot.slane %v510, 2
        %v512 = vadd.f32 %v510, %v511
        %v513 = vrot.slane %v512, 1
        %v514 = vadd.f32 %v512, %v513
        %v515 = vmul.f32 %v493, %v406
        %v516 = vmul.f32 %v514, %v406
        %v517 = vadd.f32 %v515, 1e-05
        %v518 = vadd.f32 %v516, 1e-05
        %v519 = vrsqrt.pop %v517
        %v520 = vrsqrt.pop %v518
        %v521 = vmul.f32 %v409, %v519
        %v522 = vmul.f32 %v410, %v520
        %v523 = vmul.f32 %v411, %v519
        %v524 = vmul.f32 %v412, %v520
        %v525 = vmul.f32 %v413, %v519
        %v526 = vmul.f32 %v414, %v520
        %v527 = vmul.f32 %v415, %v519
        %v528 = vmul.f32 %v416, %v520
        %v529 = vmul.f32 %v417, %v519
        %v530 = vmul.f32 %v418, %v520
        %v531 = vmul.f32 %v419, %v519
        %v532 = vmul.f32 %v420, %v520
        %v533 = vmul.f32 %v421, %v519
        %v534 = vmul.f32 %v422, %v520
        %v535 = vmul.f32 %v423, %v519
        %v536 = vmul.f32 %v424, %v520
        %v537 = vmul.f32 %v425, %v519
        %v538 = vmul.f32 %v426, %v520
        %v539 = vmul.f32 %v427, %v519
        %v540 = vmul.f32 %v428, %v520
        %v541 = vmul.f32 %v429, %v519
        %v542 = vmul.f32 %v430, %v520
        %v543 = vmul.f32 %v431, %v519
        %v544 = vmul.f32 %v432, %v520
        %v545 = vmul.f32 %v433, %v519
        %v546 = vmul.f32 %v434, %v520
        %v547 = vmul.f32 %v435, %v519
        %v548 = vmul.f32 %v436, %v520
        %v549 = vmul.f32 %v437, %v519
        %v550 = vmul.f32 %v438, %v520
        %v551 = vmul.f32 %v439, %v519
        %v552 = vmul.f32 %v440, %v520
        %v553 = vld [vmem:[%s1] sm:$0xff]
        %v554 = vld [vmem:[%s1 + $0x8] sm:$0xff]
        %v555 = vld [vmem:[%s1 + $0x10] sm:$0xff]
        %v556 = vld [vmem:[%s1 + $0x18] sm:$0xff]
        %v557 = vld [vmem:[%s1 + $0x20] sm:$0xff]
        %v558 = vld [vmem:[%s1 + $0x28] sm:$0xff]
        %v559 = vld [vmem:[%s1 + $0x30] sm:$0xff]
        %v560 = vld [vmem:[%s1 + $0x38] sm:$0xff]
        %v561 = vld [vmem:[%s1 + $0x40] sm:$0xff]
        %v562 = vld [vmem:[%s1 + $0x48] sm:$0xff]
        %v563 = vld [vmem:[%s1 + $0x50] sm:$0xff]
        %v564 = vld [vmem:[%s1 + $0x58] sm:$0xff]
        %v565 = vld [vmem:[%s1 + $0x60] sm:$0xff]
        %v566 = vld [vmem:[%s1 + $0x68] sm:$0xff]
        %v567 = vld [vmem:[%s1 + $0x70] sm:$0xff]
        %v568 = vld [vmem:[%s1 + $0x78] sm:$0xff]
        %570 = vset.pattern.permute.xlu0 0
        %571 = vperm.xlu0 %570, %v553
        %v572 = vpop.permute.xlu0 %571
        %575 = vset.pattern.permute.xlu0 0
        %576 = vperm.xlu0 %575, %v554
        %v577 = vpop.permute.xlu0 %576
        %580 = vset.pattern.permute.xlu0 0
        %581 = vperm.xlu0 %580, %v555
        %v582 = vpop.permute.xlu0 %581
        %585 = vset.pattern.permute.xlu0 0
        %586 = vperm.xlu0 %585, %v556
        %v587 = vpop.permute.xlu0 %586
        %590 = vset.pattern.permute.xlu0 0
        %591 = vperm.xlu0 %590, %v557
        %v592 = vpop.permute.xlu0 %591
        %595 = vset.pattern.permute.xlu0 0
        %596 = vperm.xlu0 %595, %v558
        %v597 = vpop.permute.xlu0 %596
        %600 = vset.pattern.permute.xlu0 0
        %601 = vperm.xlu0 %600, %v559
        %v602 = vpop.permute.xlu0 %601
        %605 = vset.pattern.permute.xlu0 0
        %606 = vperm.xlu0 %605, %v560
        %v607 = vpop.permute.xlu0 %606
        %610 = vset.pattern.permute.xlu0 0
        %611 = vperm.xlu0 %610, %v561
        %v612 = vpop.permute.xlu0 %611
        %615 = vset.pattern.permute.xlu0 0
        %616 = vperm.xlu0 %615, %v562
        %v617 = vpop.permute.xlu0 %616
        %620 = vset.pattern.permute.xlu0 0
        %621 = vperm.xlu0 %620, %v563
        %v622 = vpop.permute.xlu0 %621
        %625 = vset.pattern.permute.xlu0 0
        %626 = vperm.xlu0 %625, %v564
        %v627 = vpop.permute.xlu0 %626
        %630 = vset.pattern.permute.xlu0 0
        %631 = vperm.xlu0 %630, %v565
        %v632 = vpop.permute.xlu0 %631
        %635 = vset.pattern.permute.xlu0 0
        %636 = vperm.xlu0 %635, %v566
        %v637 = vpop.permute.xlu0 %636
        %640 = vset.pattern.permute.xlu0 0
        %641 = vperm.xlu0 %640, %v567
        %v642 = vpop.permute.xlu0 %641
        %645 = vset.pattern.permute.xlu0 0
        %646 = vperm.xlu0 %645, %v568
        %v647 = vpop.permute.xlu0 %646
        %v649 = vmul.f32 %v521, %v572
        %v650 = vmul.f32 %v522, %v572
        %v651 = vmul.f32 %v523, %v577
        %v652 = vmul.f32 %v524, %v577
        %v653 = vmul.f32 %v525, %v582
        %v654 = vmul.f32 %v526, %v582
        %v655 = vmul.f32 %v527, %v587
        %v656 = vmul.f32 %v528, %v587
        %v657 = vmul.f32 %v529, %v592
        %v658 = vmul.f32 %v530, %v592
        %v659 = vmul.f32 %v531, %v597
        %v660 = vmul.f32 %v532, %v597
        %v661 = vmul.f32 %v533, %v602
        %v662 = vmul.f32 %v534, %v602
        %v663 = vmul.f32 %v535, %v607
        %v664 = vmul.f32 %v536, %v607
        %v665 = vmul.f32 %v537, %v612
        %v666 = vmul.f32 %v538, %v612
        %v667 = vmul.f32 %v539, %v617
        %v668 = vmul.f32 %v540, %v617
        %v669 = vmul.f32 %v541, %v622
        %v670 = vmul.f32 %v542, %v622
        %v671 = vmul.f32 %v543, %v627
        %v672 = vmul.f32 %v544, %v627
        %v673 = vmul.f32 %v545, %v632
        %v674 = vmul.f32 %v546, %v632
        %v675 = vmul.f32 %v547, %v637
        %v676 = vmul.f32 %v548, %v637
        %v677 = vmul.f32 %v549, %v642
        %v678 = vmul.f32 %v550, %v642
        %v679 = vmul.f32 %v551, %v647
        %v680 = vmul.f32 %v552, %v647
        %v681 = vld [vmem:[%s2] sm:$0xff]
        %v682 = vld [vmem:[%s2 + $0x8] sm:$0xff]
        %v683 = vld [vmem:[%s2 + $0x10] sm:$0xff]
        %v684 = vld [vmem:[%s2 + $0x18] sm:$0xff]
        %v685 = vld [vmem:[%s2 + $0x20] sm:$0xff]
        %v686 = vld [vmem:[%s2 + $0x28] sm:$0xff]
        %v687 = vld [vmem:[%s2 + $0x30] sm:$0xff]
        %v688 = vld [vmem:[%s2 + $0x38] sm:$0xff]
        %v689 = vld [vmem:[%s2 + $0x40] sm:$0xff]
        %v690 = vld [vmem:[%s2 + $0x48] sm:$0xff]
        %v691 = vld [vmem:[%s2 + $0x50] sm:$0xff]
        %v692 = vld [vmem:[%s2 + $0x58] sm:$0xff]
        %v693 = vld [vmem:[%s2 + $0x60] sm:$0xff]
        %v694 = vld [vmem:[%s2 + $0x68] sm:$0xff]
        %v695 = vld [vmem:[%s2 + $0x70] sm:$0xff]
        %v696 = vld [vmem:[%s2 + $0x78] sm:$0xff]
        %698 = vset.pattern.permute.xlu0 0
        %699 = vperm.xlu0 %698, %v681
        %v700 = vpop.permute.xlu0 %699
        %703 = vset.pattern.permute.xlu0 0
        %704 = vperm.xlu0 %703, %v682
        %v705 = vpop.permute.xlu0 %704
        %708 = vset.pattern.permute.xlu0 0
        %709 = vperm.xlu0 %708, %v683
        %v710 = vpop.permute.xlu0 %709
        %713 = vset.pattern.permute.xlu0 0
        %714 = vperm.xlu0 %713, %v684
        %v715 = vpop.permute.xlu0 %714
        %718 = vset.pattern.permute.xlu0 0
        %719 = vperm.xlu0 %718, %v685
        %v720 = vpop.permute.xlu0 %719
        %723 = vset.pattern.permute.xlu0 0
        %724 = vperm.xlu0 %723, %v686
        %v725 = vpop.permute.xlu0 %724
        %728 = vset.pattern.permute.xlu0 0
        %729 = vperm.xlu0 %728, %v687
        %v730 = vpop.permute.xlu0 %729
        %733 = vset.pattern.permute.xlu0 0
        %734 = vperm.xlu0 %733, %v688
        %v735 = vpop.permute.xlu0 %734
        %738 = vset.pattern.permute.xlu0 0
        %739 = vperm.xlu0 %738, %v689
        %v740 = vpop.permute.xlu0 %739
        %743 = vset.pattern.permute.xlu0 0
        %744 = vperm.xlu0 %743, %v690
        %v745 = vpop.permute.xlu0 %744
        %748 = vset.pattern.permute.xlu0 0
        %749 = vperm.xlu0 %748, %v691
        %v750 = vpop.permute.xlu0 %749
        %753 = vset.pattern.permute.xlu0 0
        %754 = vperm.xlu0 %753, %v692
        %v755 = vpop.permute.xlu0 %754
        %758 = vset.pattern.permute.xlu0 0
        %759 = vperm.xlu0 %758, %v693
        %v760 = vpop.permute.xlu0 %759
        %763 = vset.pattern.permute.xlu0 0
        %764 = vperm.xlu0 %763, %v694
        %v765 = vpop.permute.xlu0 %764
        %768 = vset.pattern.permute.xlu0 0
        %769 = vperm.xlu0 %768, %v695
        %v770 = vpop.permute.xlu0 %769
        %773 = vset.pattern.permute.xlu0 0
        %774 = vperm.xlu0 %773, %v696
        %v775 = vpop.permute.xlu0 %774
        %v777 = vadd.f32 %v649, %v700
        %v778 = vadd.f32 %v650, %v700
        %v779 = vadd.f32 %v651, %v705
        %v780 = vadd.f32 %v652, %v705
        %v781 = vadd.f32 %v653, %v710
        %v782 = vadd.f32 %v654, %v710
        %v783 = vadd.f32 %v655, %v715
        %v784 = vadd.f32 %v656, %v715
        %v785 = vadd.f32 %v657, %v720
        %v786 = vadd.f32 %v658, %v720
        %v787 = vadd.f32 %v659, %v725
        %v788 = vadd.f32 %v660, %v725
        %v789 = vadd.f32 %v661, %v730
        %v790 = vadd.f32 %v662, %v730
        %v791 = vadd.f32 %v663, %v735
        %v792 = vadd.f32 %v664, %v735
        %v793 = vadd.f32 %v665, %v740
        %v794 = vadd.f32 %v666, %v740
        %v795 = vadd.f32 %v667, %v745
        %v796 = vadd.f32 %v668, %v745
        %v797 = vadd.f32 %v669, %v750
        %v798 = vadd.f32 %v670, %v750
        %v799 = vadd.f32 %v671, %v755
        %v800 = vadd.f32 %v672, %v755
        %v801 = vadd.f32 %v673, %v760
        %v802 = vadd.f32 %v674, %v760
        %v803 = vadd.f32 %v675, %v765
        %v804 = vadd.f32 %v676, %v765
        %v805 = vadd.f32 %v677, %v770
        %v806 = vadd.f32 %v678, %v770
        %v807 = vadd.f32 %v679, %v775
        %v808 = vadd.f32 %v680, %v775
        %v809 = vld [vmem:[%s3] sm:$0xff]
        %v810 = vld [vmem:[%s3 + $0x8] sm:$0xff]
        %v811 = vld [vmem:[%s3 + $0x10] sm:$0xff]
        %v812 = vld [vmem:[%s3 + $0x18] sm:$0xff]
        %v813 = vld [vmem:[%s3 + $0x20] sm:$0xff]
        %v814 = vld [vmem:[%s3 + $0x28] sm:$0xff]
        %v815 = vld [vmem:[%s3 + $0x30] sm:$0xff]
        %v816 = vld [vmem:[%s3 + $0x38] sm:$0xff]
        %v817 = vld [vmem:[%s3 + $0x40] sm:$0xff]
        %v818 = vld [vmem:[%s3 + $0x48] sm:$0xff]
        %v819 = vld [vmem:[%s3 + $0x50] sm:$0xff]
        %v820 = vld [vmem:[%s3 + $0x58] sm:$0xff]
        %v821 = vld [vmem:[%s3 + $0x60] sm:$0xff]
        %v822 = vld [vmem:[%s3 + $0x68] sm:$0xff]
        %v823 = vld [vmem:[%s3 + $0x70] sm:$0xff]
        %v824 = vld [vmem:[%s3 + $0x78] sm:$0xff]
        %v825 = vld [vmem:[%s3 + $0x80] sm:$0xff]
        %v826 = vld [vmem:[%s3 + $0x88] sm:$0xff]
        %v827 = vld [vmem:[%s3 + $0x90] sm:$0xff]
        %v828 = vld [vmem:[%s3 + $0x98] sm:$0xff]
        %v829 = vld [vmem:[%s3 + $0xa0] sm:$0xff]
        %v830 = vld [vmem:[%s3 + $0xa8] sm:$0xff]
        %v831 = vld [vmem:[%s3 + $0xb0] sm:$0xff]
        %v832 = vld [vmem:[%s3 + $0xb8] sm:$0xff]
        %v833 = vld [vmem:[%s3 + $0xc0] sm:$0xff]
        %v834 = vld [vmem:[%s3 + $0xc8] sm:$0xff]
        %v835 = vld [vmem:[%s3 + $0xd0] sm:$0xff]
        %v836 = vld [vmem:[%s3 + $0xd8] sm:$0xff]
        %v837 = vld [vmem:[%s3 + $0xe0] sm:$0xff]
        %v838 = vld [vmem:[%s3 + $0xe8] sm:$0xff]
        %v839 = vld [vmem:[%s3 + $0xf0] sm:$0xff]
        %v840 = vld [vmem:[%s3 + $0xf8] sm:$0xff]
        %v841 = vld [vmem:[%s3 + $0x100] sm:$0xff]
        %v842 = vld [vmem:[%s3 + $0x108] sm:$0xff]
        %v843 = vld [vmem:[%s3 + $0x110] sm:$0xff]
        %v844 = vld [vmem:[%s3 + $0x118] sm:$0xff]
        %v845 = vld [vmem:[%s3 + $0x120] sm:$0xff]
        %v846 = vld [vmem:[%s3 + $0x128] sm:$0xff]
        %v847 = vld [vmem:[%s3 + $0x130] sm:$0xff]
        %v848 = vld [vmem:[%s3 + $0x138] sm:$0xff]
        %v849 = vld [vmem:[%s3 + $0x140] sm:$0xff]
        %v850 = vld [vmem:[%s3 + $0x148] sm:$0xff]
        %v851 = vld [vmem:[%s3 + $0x150] sm:$0xff]
        %v852 = vld [vmem:[%s3 + $0x158] sm:$0xff]
        %v853 = vld [vmem:[%s3 + $0x160] sm:$0xff]
        %v854 = vld [vmem:[%s3 + $0x168] sm:$0xff]
        %v855 = vld [vmem:[%s3 + $0x170] sm:$0xff]
        %v856 = vld [vmem:[%s3 + $0x178] sm:$0xff]
        %v857 = vld [vmem:[%s3 + $0x180] sm:$0xff]
        %v858 = vld [vmem:[%s3 + $0x188] sm:$0xff]
        %v859 = vld [vmem:[%s3 + $0x190] sm:$0xff]
        %v860 = vld [vmem:[%s3 + $0x198] sm:$0xff]
        %v861 = vld [vmem:[%s3 + $0x1a0] sm:$0xff]
        %v862 = vld [vmem:[%s3 + $0x1a8] sm:$0xff]
        %v863 = vld [vmem:[%s3 + $0x1b0] sm:$0xff]
        %v864 = vld [vmem:[%s3 + $0x1b8] sm:$0xff]
        %v865 = vld [vmem:[%s3 + $0x1c0] sm:$0xff]
        %v866 = vld [vmem:[%s3 + $0x1c8] sm:$0xff]
        %v867 = vld [vmem:[%s3 + $0x1d0] sm:$0xff]
        %v868 = vld [vmem:[%s3 + $0x1d8] sm:$0xff]
        %v869 = vld [vmem:[%s3 + $0x1e0] sm:$0xff]
        %v870 = vld [vmem:[%s3 + $0x1e8] sm:$0xff]
        %v871 = vld [vmem:[%s3 + $0x1f0] sm:$0xff]
        %v872 = vld [vmem:[%s3 + $0x1f8] sm:$0xff]
        %v873 = vld [vmem:[%s4] sm:$0xff]
        %v874 = vld [vmem:[%s4 + $0x8] sm:$0xff]
        %v875 = vld [vmem:[%s4 + $0x10] sm:$0xff]
        %v876 = vld [vmem:[%s4 + $0x18] sm:$0xff]
        %v877 = vld [vmem:[%s4 + $0x20] sm:$0xff]
        %v878 = vld [vmem:[%s4 + $0x28] sm:$0xff]
        %v879 = vld [vmem:[%s4 + $0x30] sm:$0xff]
        %v880 = vld [vmem:[%s4 + $0x38] sm:$0xff]
        %v881 = vld [vmem:[%s4 + $0x40] sm:$0xff]
        %v882 = vld [vmem:[%s4 + $0x48] sm:$0xff]
        %v883 = vld [vmem:[%s4 + $0x50] sm:$0xff]
        %v884 = vld [vmem:[%s4 + $0x58] sm:$0xff]
        %v885 = vld [vmem:[%s4 + $0x60] sm:$0xff]
        %v886 = vld [vmem:[%s4 + $0x68] sm:$0xff]
        %v887 = vld [vmem:[%s4 + $0x70] sm:$0xff]
        %v888 = vld [vmem:[%s4 + $0x78] sm:$0xff]
        %v889 = vld [vmem:[%s4 + $0x80] sm:$0xff]
        %v890 = vld [vmem:[%s4 + $0x88] sm:$0xff]
        %v891 = vld [vmem:[%s4 + $0x90] sm:$0xff]
        %v892 = vld [vmem:[%s4 + $0x98] sm:$0xff]
        %v893 = vld [vmem:[%s4 + $0xa0] sm:$0xff]
        %v894 = vld [vmem:[%s4 + $0xa8] sm:$0xff]
        %v895 = vld [vmem:[%s4 + $0xb0] sm:$0xff]
        %v896 = vld [vmem:[%s4 + $0xb8] sm:$0xff]
        %v897 = vld [vmem:[%s4 + $0xc0] sm:$0xff]
        %v898 = vld [vmem:[%s4 + $0xc8] sm:$0xff]
        %v899 = vld [vmem:[%s4 + $0xd0] sm:$0xff]
        %v900 = vld [vmem:[%s4 + $0xd8] sm:$0xff]
        %v901 = vld [vmem:[%s4 + $0xe0] sm:$0xff]
        %v902 = vld [vmem:[%s4 + $0xe8] sm:$0xff]
        %v903 = vld [vmem:[%s4 + $0xf0] sm:$0xff]
        %v904 = vld [vmem:[%s4 + $0xf8] sm:$0xff]
        %v905 = vld [vmem:[%s4 + $0x100] sm:$0xff]
        %v906 = vld [vmem:[%s4 + $0x108] sm:$0xff]
        %v907 = vld [vmem:[%s4 + $0x110] sm:$0xff]
        %v908 = vld [vmem:[%s4 + $0x118] sm:$0xff]
        %v909 = vld [vmem:[%s4 + $0x120] sm:$0xff]
        %v910 = vld [vmem:[%s4 + $0x128] sm:$0xff]
        %v911 = vld [vmem:[%s4 + $0x130] sm:$0xff]
        %v912 = vld [vmem:[%s4 + $0x138] sm:$0xff]
        %v913 = vld [vmem:[%s4 + $0x140] sm:$0xff]
        %v914 = vld [vmem:[%s4 + $0x148] sm:$0xff]
        %v915 = vld [vmem:[%s4 + $0x150] sm:$0xff]
        %v916 = vld [vmem:[%s4 + $0x158] sm:$0xff]
        %v917 = vld [vmem:[%s4 + $0x160] sm:$0xff]
        %v918 = vld [vmem:[%s4 + $0x168] sm:$0xff]
        %v919 = vld [vmem:[%s4 + $0x170] sm:$0xff]
        %v920 = vld [vmem:[%s4 + $0x178] sm:$0xff]
        %v921 = vld [vmem:[%s4 + $0x180] sm:$0xff]
        %v922 = vld [vmem:[%s4 + $0x188] sm:$0xff]
        %v923 = vld [vmem:[%s4 + $0x190] sm:$0xff]
        %v924 = vld [vmem:[%s4 + $0x198] sm:$0xff]
        %v925 = vld [vmem:[%s4 + $0x1a0] sm:$0xff]
        %v926 = vld [vmem:[%s4 + $0x1a8] sm:$0xff]
        %v927 = vld [vmem:[%s4 + $0x1b0] sm:$0xff]
        %v928 = vld [vmem:[%s4 + $0x1b8] sm:$0xff]
        %v929 = vld [vmem:[%s4 + $0x1c0] sm:$0xff]
        %v930 = vld [vmem:[%s4 + $0x1c8] sm:$0xff]
        %v931 = vld [vmem:[%s4 + $0x1d0] sm:$0xff]
        %v932 = vld [vmem:[%s4 + $0x1d8] sm:$0xff]
        %v933 = vld [vmem:[%s4 + $0x1e0] sm:$0xff]
        %v934 = vld [vmem:[%s4 + $0x1e8] sm:$0xff]
        %v935 = vld [vmem:[%s4 + $0x1f0] sm:$0xff]
        %v936 = vld [vmem:[%s4 + $0x1f8] sm:$0xff]
        %938 = vset.pattern.permute.xlu0 0
        %939 = vperm.xlu0 %938, %v873
        %v940 = vpop.permute.xlu0 %939
        %943 = vset.pattern.permute.xlu0 0
        %944 = vperm.xlu0 %943, %v874
        %v945 = vpop.permute.xlu0 %944
        %948 = vset.pattern.permute.xlu0 0
        %949 = vperm.xlu0 %948, %v875
        %v950 = vpop.permute.xlu0 %949
        %953 = vset.pattern.permute.xlu0 0
        %954 = vperm.xlu0 %953, %v876
        %v955 = vpop.permute.xlu0 %954
        %958 = vset.pattern.permute.xlu0 0
        %959 = vperm.xlu0 %958, %v877
        %v960 = vpop.permute.xlu0 %959
        %963 = vset.pattern.permute.xlu0 0
        %964 = vperm.xlu0 %963, %v878
        %v965 = vpop.permute.xlu0 %964
        %968 = vset.pattern.permute.xlu0 0
        %969 = vperm.xlu0 %968, %v879
        %v970 = vpop.permute.xlu0 %969
        %973 = vset.pattern.permute.xlu0 0
        %974 = vperm.xlu0 %973, %v880
        %v975 = vpop.permute.xlu0 %974
        %978 = vset.pattern.permute.xlu0 0
        %979 = vperm.xlu0 %978, %v881
        %v980 = vpop.permute.xlu0 %979
        %983 = vset.pattern.permute.xlu0 0
        %984 = vperm.xlu0 %983, %v882
        %v985 = vpop.permute.xlu0 %984
        %988 = vset.pattern.permute.xlu0 0
        %989 = vperm.xlu0 %988, %v883
        %v990 = vpop.permute.xlu0 %989
        %993 = vset.pattern.permute.xlu0 0
        %994 = vperm.xlu0 %993, %v884
        %v995 = vpop.permute.xlu0 %994
        %998 = vset.pattern.permute.xlu0 0
        %999 = vperm.xlu0 %998, %v885
        %v1000 = vpop.permute.xlu0 %999
        %1003 = vset.pattern.permute.xlu0 0
        %1004 = vperm.xlu0 %1003, %v886
        %v1005 = vpop.permute.xlu0 %1004
        %1008 = vset.pattern.permute.xlu0 0
        %1009 = vperm.xlu0 %1008, %v887
        %v1010 = vpop.permute.xlu0 %1009
        %1013 = vset.pattern.permute.xlu0 0
        %1014 = vperm.xlu0 %1013, %v888
        %v1015 = vpop.permute.xlu0 %1014
        %1018 = vset.pattern.permute.xlu0 0
        %1019 = vperm.xlu0 %1018, %v889
        %v1020 = vpop.permute.xlu0 %1019
        %1023 = vset.pattern.permute.xlu0 0
        %1024 = vperm.xlu0 %1023, %v890
        %v1025 = vpop.permute.xlu0 %1024
        %1028 = vset.pattern.permute.xlu0 0
        %1029 = vperm.xlu0 %1028, %v891
        %v1030 = vpop.permute.xlu0 %1029
        %1033 = vset.pattern.permute.xlu0 0
        %1034 = vperm.xlu0 %1033, %v892
        %v1035 = vpop.permute.xlu0 %1034
        %1038 = vset.pattern.permute.xlu0 0
        %1039 = vperm.xlu0 %1038, %v893
        %v1040 = vpop.permute.xlu0 %1039
        %1043 = vset.pattern.permute.xlu0 0
        %1044 = vperm.xlu0 %1043, %v894
        %v1045 = vpop.permute.xlu0 %1044
        %1048 = vset.pattern.permute.xlu0 0
        %1049 = vperm.xlu0 %1048, %v895
        %v1050 = vpop.permute.xlu0 %1049
        %1053 = vset.pattern.permute.xlu0 0
        %1054 = vperm.xlu0 %1053, %v896
        %v1055 = vpop.permute.xlu0 %1054
        %1058 = vset.pattern.permute.xlu0 0
        %1059 = vperm.xlu0 %1058, %v897
        %v1060 = vpop.permute.xlu0 %1059
        %1063 = vset.pattern.permute.xlu0 0
        %1064 = vperm.xlu0 %1063, %v898
        %v1065 = vpop.permute.xlu0 %1064
        %1068 = vset.pattern.permute.xlu0 0
        %1069 = vperm.xlu0 %1068, %v899
        %v1070 = vpop.permute.xlu0 %1069
        %1073 = vset.pattern.permute.xlu0 0
        %1074 = vperm.xlu0 %1073, %v900
        %v1075 = vpop.permute.xlu0 %1074
        %1078 = vset.pattern.permute.xlu0 0
        %1079 = vperm.xlu0 %1078, %v901
        %v1080 = vpop.permute.xlu0 %1079
        %1083 = vset.pattern.permute.xlu0 0
        %1084 = vperm.xlu0 %1083, %v902
        %v1085 = vpop.permute.xlu0 %1084
        %1088 = vset.pattern.permute.xlu0 0
        %1089 = vperm.xlu0 %1088, %v903
        %v1090 = vpop.permute.xlu0 %1089
        %1093 = vset.pattern.permute.xlu0 0
        %1094 = vperm.xlu0 %1093, %v904
        %v1095 = vpop.permute.xlu0 %1094
        %1098 = vset.pattern.permute.xlu0 0
        %1099 = vperm.xlu0 %1098, %v905
        %v1100 = vpop.permute.xlu0 %1099
        %1103 = vset.pattern.permute.xlu0 0
        %1104 = vperm.xlu0 %1103, %v906
        %v1105 = vpop.permute.xlu0 %1104
        %1108 = vset.pattern.permute.xlu0 0
        %1109 = vperm.xlu0 %1108, %v907
        %v1110 = vpop.permute.xlu0 %1109
        %1113 = vset.pattern.permute.xlu0 0
        %1114 = vperm.xlu0 %1113, %v908
        %v1115 = vpop.permute.xlu0 %1114
        %1118 = vset.pattern.permute.xlu0 0
        %1119 = vperm.xlu0 %1118, %v909
        %v1120 = vpop.permute.xlu0 %1119
        %1123 = vset.pattern.permute.xlu0 0
        %1124 = vperm.xlu0 %1123, %v910
        %v1125 = vpop.permute.xlu0 %1124
        %1128 = vset.pattern.permute.xlu0 0
        %1129 = vperm.xlu0 %1128, %v911
        %v1130 = vpop.permute.xlu0 %1129
        %1133 = vset.pattern.permute.xlu0 0
        %1134 = vperm.xlu0 %1133, %v912
        %v1135 = vpop.permute.xlu0 %1134
        %1138 = vset.pattern.permute.xlu0 0
        %1139 = vperm.xlu0 %1138, %v913
        %v1140 = vpop.permute.xlu0 %1139
        %1143 = vset.pattern.permute.xlu0 0
        %1144 = vperm.xlu0 %1143, %v914
        %v1145 = vpop.permute.xlu0 %1144
        %1148 = vset.pattern.permute.xlu0 0
        %1149 = vperm.xlu0 %1148, %v915
        %v1150 = vpop.permute.xlu0 %1149
        %1153 = vset.pattern.permute.xlu0 0
        %1154 = vperm.xlu0 %1153, %v916
        %v1155 = vpop.permute.xlu0 %1154
        %1158 = vset.pattern.permute.xlu0 0
        %1159 = vperm.xlu0 %1158, %v917
        %v1160 = vpop.permute.xlu0 %1159
        %1163 = vset.pattern.permute.xlu0 0
        %1164 = vperm.xlu0 %1163, %v918
        %v1165 = vpop.permute.xlu0 %1164
        %1168 = vset.pattern.permute.xlu0 0
        %1169 = vperm.xlu0 %1168, %v919
        %v1170 = vpop.permute.xlu0 %1169
        %1173 = vset.pattern.permute.xlu0 0
        %1174 = vperm.xlu0 %1173, %v920
        %v1175 = vpop.permute.xlu0 %1174
        %1178 = vset.pattern.permute.xlu0 0
        %1179 = vperm.xlu0 %1178, %v921
        %v1180 = vpop.permute.xlu0 %1179
        %1183 = vset.pattern.permute.xlu0 0
        %1184 = vperm.xlu0 %1183, %v922
        %v1185 = vpop.permute.xlu0 %1184
        %1188 = vset.pattern.permute.xlu0 0
        %1189 = vperm.xlu0 %1188, %v923
        %v1190 = vpop.permute.xlu0 %1189
        %1193 = vset.pattern.permute.xlu0 0
        %1194 = vperm.xlu0 %1193, %v924
        %v1195 = vpop.permute.xlu0 %1194
        %1198 = vset.pattern.permute.xlu0 0
        %1199 = vperm.xlu0 %1198, %v925
        %v1200 = vpop.permute.xlu0 %1199
        %1203 = vset.pattern.permute.xlu0 0
        %1204 = vperm.xlu0 %1203, %v926
        %v1205 = vpop.permute.xlu0 %1204
        %1208 = vset.pattern.permute.xlu0 0
        %1209 = vperm.xlu0 %1208, %v927
        %v1210 = vpop.permute.xlu0 %1209
        %1213 = vset.pattern.permute.xlu0 0
        %1214 = vperm.xlu0 %1213, %v928
        %v1215 = vpop.permute.xlu0 %1214
        %1218 = vset.pattern.permute.xlu0 0
        %1219 = vperm.xlu0 %1218, %v929
        %v1220 = vpop.permute.xlu0 %1219
        %1223 = vset.pattern.permute.xlu0 0
        %1224 = vperm.xlu0 %1223, %v930
        %v1225 = vpop.permute.xlu0 %1224
        %1228 = vset.pattern.permute.xlu0 0
        %1229 = vperm.xlu0 %1228, %v931
        %v1230 = vpop.permute.xlu0 %1229
        %1233 = vset.pattern.permute.xlu0 0
        %1234 = vperm.xlu0 %1233, %v932
        %v1235 = vpop.permute.xlu0 %1234
        %1238 = vset.pattern.permute.xlu0 0
        %1239 = vperm.xlu0 %1238, %v933
        %v1240 = vpop.permute.xlu0 %1239
        %1243 = vset.pattern.permute.xlu0 0
        %1244 = vperm.xlu0 %1243, %v934
        %v1245 = vpop.permute.xlu0 %1244
        %1248 = vset.pattern.permute.xlu0 0
        %1249 = vperm.xlu0 %1248, %v935
        %v1250 = vpop.permute.xlu0 %1249
        %1253 = vset.pattern.permute.xlu0 0
        %1254 = vperm.xlu0 %1253, %v936
        %v1255 = vpop.permute.xlu0 %1254
        %1257 = vmatprep.subr.mxu0 %v808
        %1258 = vmatpush1.msra.mxu0 %v807
        %1259 = vmatprep.subr.mxu0 %v806
        %1260 = vmatpush1.msra.mxu0 %v805
        %1261 = vmatprep.subr.mxu0 %v804
        %1262 = vmatpush1.msra.mxu0 %v803
        %1263 = vmatprep.subr.mxu0 %v802
        %1264 = vmatpush1.msra.mxu0 %v801
        %1265 = vmatprep.subr.mxu0 %v800
        %1266 = vmatpush1.msra.mxu0 %v799
        %1267 = vmatprep.subr.mxu0 %v798
        %1268 = vmatpush1.msra.mxu0 %v797
        %1269 = vmatprep.subr.mxu0 %v796
        %1270 = vmatpush1.msra.mxu0 %v795
        %1271 = vmatprep.subr.mxu0 %v794
        %1272 = vmatpush1.msra.mxu0 %v793
        %1273 = vmatprep.subr.mxu0 %v792
        %1274 = vmatpush1.msra.mxu0 %v791
        %1275 = vmatprep.subr.mxu0 %v790
        %1276 = vmatpush1.msra.mxu0 %v789
        %1277 = vmatprep.subr.mxu0 %v788
        %1278 = vmatpush1.msra.mxu0 %v787
        %1279 = vmatprep.subr.mxu0 %v786
        %1280 = vmatpush1.msra.mxu0 %v785
        %1281 = vmatprep.subr.mxu0 %v784
        %1282 = vmatpush1.msra.mxu0 %v783
        %1283 = vmatprep.subr.mxu0 %v782
        %1284 = vmatpush1.msra.mxu0 %v781
        %1285 = vmatprep.subr.mxu0 %v780
        %1286 = vmatpush1.msra.mxu0 %v779
        %1287 = vmatprep.subr.mxu0 %v778
        %1288 = vmatpush1.msra.mxu0 %v777
        %1289 = vmatprep.subr.mxu0 0.0
        %1290 = vmatpush2.msra.mxu0 0.0
        %1291 = vmatprep.subr.mxu0 0.0
        %1292 = vmatpush2.msra.mxu0 0.0
        %1293 = vmatprep.subr.mxu0 0.0
        %1294 = vmatpush2.msra.mxu0 0.0
        %1295 = vmatprep.subr.mxu0 0.0
        %1296 = vmatpush2.msra.mxu0 0.0
        %1297 = vmatprep.subr.mxu0 0.0
        %1298 = vmatpush2.msra.mxu0 0.0
        %1299 = vmatprep.subr.mxu0 0.0
        %1300 = vmatpush2.msra.mxu0 0.0
        %1301 = vmatprep.subr.mxu0 0.0
        %1302 = vmatpush2.msra.mxu0 0.0
        %1303 = vmatprep.subr.mxu0 0.0
        %1304 = vmatpush2.msra.mxu0 0.0
        %1305 = vmatprep.subr.mxu0 0.0
        %1306 = vmatpush2.msra.mxu0 0.0
        %1307 = vmatprep.subr.mxu0 0.0
        %1308 = vmatpush2.msra.mxu0 0.0
        %1309 = vmatprep.subr.mxu0 0.0
        %1310 = vmatpush2.msra.mxu0 0.0
        %1311 = vmatprep.subr.mxu0 0.0
        %1312 = vmatpush2.msra.mxu0 0.0
        %1313 = vmatprep.subr.mxu0 0.0
        %1314 = vmatpush2.msra.mxu0 0.0
        %1315 = vmatprep.subr.mxu0 0.0
        %1316 = vmatpush2.msra.mxu0 0.0
        %1317 = vmatprep.subr.mxu0 0.0
        %1318 = vmatpush2.msra.mxu0 0.0
        %1319 = vmatprep.subr.mxu0 0.0
        %1320 = vmatpush2.msra.mxu0 0.0
        %1321 = vmatprep.mubr.f32.mxu0 0.0
        %1322 = vmatmul.mubr.f32.gmra.mxu0 %v809
        %v1323 = vpop.f32.mrf.mxu0
        %v1324 = vadd.f32 %v940, %v1323
        %v1325 = vpop.f32.mrf.mxu0
        %v1326 = vadd.f32 %v940, %v1325
        %1327 = vmatprep.mubr.f32.mxu0 0.0
        %1328 = vmatmul.mubr.f32.gmra.mxu0 %v810
        %v1329 = vpop.f32.mrf.mxu0
        %v1330 = vadd.f32 %v945, %v1329
        %v1331 = vpop.f32.mrf.mxu0
        %v1332 = vadd.f32 %v945, %v1331
        %1333 = vmatprep.mubr.f32.mxu0 0.0
        %1334 = vmatmul.mubr.f32.gmra.mxu0 %v811
        %v1335 = vpop.f32.mrf.mxu0
        %v1336 = vadd.f32 %v950, %v1335
        %v1337 = vpop.f32.mrf.mxu0
        %v1338 = vadd.f32 %v950, %v1337
        %1339 = vmatprep.mubr.f32.mxu0 0.0
        %1340 = vmatmul.mubr.f32.gmra.mxu0 %v812
        %v1341 = vpop.f32.mrf.mxu0
        %v1342 = vadd.f32 %v955, %v1341
        %v1343 = vpop.f32.mrf.mxu0
        %v1344 = vadd.f32 %v955, %v1343
        %1345 = vmatprep.mubr.f32.mxu0 0.0
        %1346 = vmatmul.mubr.f32.gmra.mxu0 %v813
        %v1347 = vpop.f32.mrf.mxu0
        %v1348 = vadd.f32 %v960, %v1347
        %v1349 = vpop.f32.mrf.mxu0
        %v1350 = vadd.f32 %v960, %v1349
        %1351 = vmatprep.mubr.f32.mxu0 0.0
        %1352 = vmatmul.mubr.f32.gmra.mxu0 %v814
        %v1353 = vpop.f32.mrf.mxu0
        %v1354 = vadd.f32 %v965, %v1353
        %v1355 = vpop.f32.mrf.mxu0
        %v1356 = vadd.f32 %v965, %v1355
        %1357 = vmatprep.mubr.f32.mxu0 0.0
        %1358 = vmatmul.mubr.f32.gmra.mxu0 %v815
        %v1359 = vpop.f32.mrf.mxu0
        %v1360 = vadd.f32 %v970, %v1359
        %v1361 = vpop.f32.mrf.mxu0
        %v1362 = vadd.f32 %v970, %v1361
        %1363 = vmatprep.mubr.f32.mxu0 0.0
        %1364 = vmatmul.mubr.f32.gmra.mxu0 %v816
        %v1365 = vpop.f32.mrf.mxu0
        %v1366 = vadd.f32 %v975, %v1365
        %v1367 = vpop.f32.mrf.mxu0
        %v1368 = vadd.f32 %v975, %v1367
        %1369 = vmatprep.mubr.f32.mxu0 0.0
        %1370 = vmatmul.mubr.f32.gmra.mxu0 %v817
        %v1371 = vpop.f32.mrf.mxu0
        %v1372 = vadd.f32 %v980, %v1371
        %v1373 = vpop.f32.mrf.mxu0
        %v1374 = vadd.f32 %v980, %v1373
        %1375 = vmatprep.mubr.f32.mxu0 0.0
        %1376 = vmatmul.mubr.f32.gmra.mxu0 %v818
        %v1377 = vpop.f32.mrf.mxu0
        %v1378 = vadd.f32 %v985, %v1377
        %v1379 = vpop.f32.mrf.mxu0
        %v1380 = vadd.f32 %v985, %v1379
        %1381 = vmatprep.mubr.f32.mxu0 0.0
        %1382 = vmatmul.mubr.f32.gmra.mxu0 %v819
        %v1383 = vpop.f32.mrf.mxu0
        %v1384 = vadd.f32 %v990, %v1383
        %v1385 = vpop.f32.mrf.mxu0
        %v1386 = vadd.f32 %v990, %v1385
        %1387 = vmatprep.mubr.f32.mxu0 0.0
        %1388 = vmatmul.mubr.f32.gmra.mxu0 %v820
        %v1389 = vpop.f32.mrf.mxu0
        %v1390 = vadd.f32 %v995, %v1389
        %v1391 = vpop.f32.mrf.mxu0
        %v1392 = vadd.f32 %v995, %v1391
        %1393 = vmatprep.mubr.f32.mxu0 0.0
        %1394 = vmatmul.mubr.f32.gmra.mxu0 %v821
        %v1395 = vpop.f32.mrf.mxu0
        %v1396 = vadd.f32 %v1000, %v1395
        %v1397 = vpop.f32.mrf.mxu0
        %v1398 = vadd.f32 %v1000, %v1397
        %1399 = vmatprep.mubr.f32.mxu0 0.0
        %1400 = vmatmul.mubr.f32.gmra.mxu0 %v822
        %v1401 = vpop.f32.mrf.mxu0
        %v1402 = vadd.f32 %v1005, %v1401
        %v1403 = vpop.f32.mrf.mxu0
        %v1404 = vadd.f32 %v1005, %v1403
        %1405 = vmatprep.mubr.f32.mxu0 0.0
        %1406 = vmatmul.mubr.f32.gmra.mxu0 %v823
        %v1407 = vpop.f32.mrf.mxu0
        %v1408 = vadd.f32 %v1010, %v1407
        %v1409 = vpop.f32.mrf.mxu0
        %v1410 = vadd.f32 %v1010, %v1409
        %1411 = vmatprep.mubr.f32.mxu0 0.0
        %1412 = vmatmul.mubr.f32.gmra.mxu0 %v824
        %v1413 = vpop.f32.mrf.mxu0
        %v1414 = vadd.f32 %v1015, %v1413
        %v1415 = vpop.f32.mrf.mxu0
        %v1416 = vadd.f32 %v1015, %v1415
        %1417 = vmatprep.mubr.f32.mxu0 0.0
        %1418 = vmatmul.mubr.f32.gmra.mxu0 %v825
        %v1419 = vpop.f32.mrf.mxu0
        %v1420 = vadd.f32 %v1020, %v1419
        %v1421 = vpop.f32.mrf.mxu0
        %v1422 = vadd.f32 %v1020, %v1421
        %1423 = vmatprep.mubr.f32.mxu0 0.0
        %1424 = vmatmul.mubr.f32.gmra.mxu0 %v826
        %v1425 = vpop.f32.mrf.mxu0
        %v1426 = vadd.f32 %v1025, %v1425
        %v1427 = vpop.f32.mrf.mxu0
        %v1428 = vadd.f32 %v1025, %v1427
        %1429 = vmatprep.mubr.f32.mxu0 0.0
        %1430 = vmatmul.mubr.f32.gmra.mxu0 %v827
        %v1431 = vpop.f32.mrf.mxu0
        %v1432 = vadd.f32 %v1030, %v1431
        %v1433 = vpop.f32.mrf.mxu0
        %v1434 = vadd.f32 %v1030, %v1433
        %1435 = vmatprep.mubr.f32.mxu0 0.0
        %1436 = vmatmul.mubr.f32.gmra.mxu0 %v828
        %v1437 = vpop.f32.mrf.mxu0
        %v1438 = vadd.f32 %v1035, %v1437
        %v1439 = vpop.f32.mrf.mxu0
        %v1440 = vadd.f32 %v1035, %v1439
        %1441 = vmatprep.mubr.f32.mxu0 0.0
        %1442 = vmatmul.mubr.f32.gmra.mxu0 %v829
        %v1443 = vpop.f32.mrf.mxu0
        %v1444 = vadd.f32 %v1040, %v1443
        %v1445 = vpop.f32.mrf.mxu0
        %v1446 = vadd.f32 %v1040, %v1445
        %1447 = vmatprep.mubr.f32.mxu0 0.0
        %1448 = vmatmul.mubr.f32.gmra.mxu0 %v830
        %v1449 = vpop.f32.mrf.mxu0
        %v1450 = vadd.f32 %v1045, %v1449
        %v1451 = vpop.f32.mrf.mxu0
        %v1452 = vadd.f32 %v1045, %v1451
        %1453 = vmatprep.mubr.f32.mxu0 0.0
        %1454 = vmatmul.mubr.f32.gmra.mxu0 %v831
        %v1455 = vpop.f32.mrf.mxu0
        %v1456 = vadd.f32 %v1050, %v1455
        %v1457 = vpop.f32.mrf.mxu0
        %v1458 = vadd.f32 %v1050, %v1457
        %1459 = vmatprep.mubr.f32.mxu0 0.0
        %1460 = vmatmul.mubr.f32.gmra.mxu0 %v832
        %v1461 = vpop.f32.mrf.mxu0
        %v1462 = vadd.f32 %v1055, %v1461
        %v1463 = vpop.f32.mrf.mxu0
        %v1464 = vadd.f32 %v1055, %v1463
        %1465 = vmatprep.mubr.f32.mxu0 0.0
        %1466 = vmatmul.mubr.f32.gmra.mxu0 %v833
        %v1467 = vpop.f32.mrf.mxu0
        %v1468 = vadd.f32 %v1060, %v1467
        %v1469 = vpop.f32.mrf.mxu0
        %v1470 = vadd.f32 %v1060, %v1469
        %1471 = vmatprep.mubr.f32.mxu0 0.0
        %1472 = vmatmul.mubr.f32.gmra.mxu0 %v834
        %v1473 = vpop.f32.mrf.mxu0
        %v1474 = vadd.f32 %v1065, %v1473
        %v1475 = vpop.f32.mrf.mxu0
        %v1476 = vadd.f32 %v1065, %v1475
        %1477 = vmatprep.mubr.f32.mxu0 0.0
        %1478 = vmatmul.mubr.f32.gmra.mxu0 %v835
        %v1479 = vpop.f32.mrf.mxu0
        %v1480 = vadd.f32 %v1070, %v1479
        %v1481 = vpop.f32.mrf.mxu0
        %v1482 = vadd.f32 %v1070, %v1481
        %1483 = vmatprep.mubr.f32.mxu0 0.0
        %1484 = vmatmul.mubr.f32.gmra.mxu0 %v836
        %v1485 = vpop.f32.mrf.mxu0
        %v1486 = vadd.f32 %v1075, %v1485
        %v1487 = vpop.f32.mrf.mxu0
        %v1488 = vadd.f32 %v1075, %v1487
        %1489 = vmatprep.mubr.f32.mxu0 0.0
        %1490 = vmatmul.mubr.f32.gmra.mxu0 %v837
        %v1491 = vpop.f32.mrf.mxu0
        %v1492 = vadd.f32 %v1080, %v1491
        %v1493 = vpop.f32.mrf.mxu0
        %v1494 = vadd.f32 %v1080, %v1493
        %1495 = vmatprep.mubr.f32.mxu0 0.0
        %1496 = vmatmul.mubr.f32.gmra.mxu0 %v838
        %v1497 = vpop.f32.mrf.mxu0
        %v1498 = vadd.f32 %v1085, %v1497
        %v1499 = vpop.f32.mrf.mxu0
        %v1500 = vadd.f32 %v1085, %v1499
        %1501 = vmatprep.mubr.f32.mxu0 0.0
        %1502 = vmatmul.mubr.f32.gmra.mxu0 %v839
        %v1503 = vpop.f32.mrf.mxu0
        %v1504 = vadd.f32 %v1090, %v1503
        %v1505 = vpop.f32.mrf.mxu0
        %v1506 = vadd.f32 %v1090, %v1505
        %1507 = vmatprep.mubr.f32.mxu0 0.0
        %1508 = vmatmul.mubr.f32.gmra.mxu0 %v840
        %v1509 = vpop.f32.mrf.mxu0
        %v1510 = vadd.f32 %v1095, %v1509
        %v1511 = vpop.f32.mrf.mxu0
        %v1512 = vadd.f32 %v1095, %v1511
        %1513 = vmatprep.mubr.f32.mxu0 0.0
        %1514 = vmatmul.mubr.f32.gmra.mxu0 %v841
        %v1515 = vpop.f32.mrf.mxu0
        %v1516 = vadd.f32 %v1100, %v1515
        %v1517 = vpop.f32.mrf.mxu0
        %v1518 = vadd.f32 %v1100, %v1517
        %1519 = vmatprep.mubr.f32.mxu0 0.0
        %1520 = vmatmul.mubr.f32.gmra.mxu0 %v842
        %v1521 = vpop.f32.mrf.mxu0
        %v1522 = vadd.f32 %v1105, %v1521
        %v1523 = vpop.f32.mrf.mxu0
        %v1524 = vadd.f32 %v1105, %v1523
        %1525 = vmatprep.mubr.f32.mxu0 0.0
        %1526 = vmatmul.mubr.f32.gmra.mxu0 %v843
        %v1527 = vpop.f32.mrf.mxu0
        %v1528 = vadd.f32 %v1110, %v1527
        %v1529 = vpop.f32.mrf.mxu0
        %v1530 = vadd.f32 %v1110, %v1529
        %1531 = vmatprep.mubr.f32.mxu0 0.0
        %1532 = vmatmul.mubr.f32.gmra.mxu0 %v844
        %v1533 = vpop.f32.mrf.mxu0
        %v1534 = vadd.f32 %v1115, %v1533
        %v1535 = vpop.f32.mrf.mxu0
        %v1536 = vadd.f32 %v1115, %v1535
        %1537 = vmatprep.mubr.f32.mxu0 0.0
        %1538 = vmatmul.mubr.f32.gmra.mxu0 %v845
        %v1539 = vpop.f32.mrf.mxu0
        %v1540 = vadd.f32 %v1120, %v1539
        %v1541 = vpop.f32.mrf.mxu0
        %v1542 = vadd.f32 %v1120, %v1541
        %1543 = vmatprep.mubr.f32.mxu0 0.0
        %1544 = vmatmul.mubr.f32.gmra.mxu0 %v846
        %v1545 = vpop.f32.mrf.mxu0
        %v1546 = vadd.f32 %v1125, %v1545
        %v1547 = vpop.f32.mrf.mxu0
        %v1548 = vadd.f32 %v1125, %v1547
        %1549 = vmatprep.mubr.f32.mxu0 0.0
        %1550 = vmatmul.mubr.f32.gmra.mxu0 %v847
        %v1551 = vpop.f32.mrf.mxu0
        %v1552 = vadd.f32 %v1130, %v1551
        %v1553 = vpop.f32.mrf.mxu0
        %v1554 = vadd.f32 %v1130, %v1553
        %1555 = vmatprep.mubr.f32.mxu0 0.0
        %1556 = vmatmul.mubr.f32.gmra.mxu0 %v848
        %v1557 = vpop.f32.mrf.mxu0
        %v1558 = vadd.f32 %v1135, %v1557
        %v1559 = vpop.f32.mrf.mxu0
        %v1560 = vadd.f32 %v1135, %v1559
        %1561 = vmatprep.mubr.f32.mxu0 0.0
        %1562 = vmatmul.mubr.f32.gmra.mxu0 %v849
        %v1563 = vpop.f32.mrf.mxu0
        %v1564 = vadd.f32 %v1140, %v1563
        %v1565 = vpop.f32.mrf.mxu0
        %v1566 = vadd.f32 %v1140, %v1565
        %1567 = vmatprep.mubr.f32.mxu0 0.0
        %1568 = vmatmul.mubr.f32.gmra.mxu0 %v850
        %v1569 = vpop.f32.mrf.mxu0
        %v1570 = vadd.f32 %v1145, %v1569
        %v1571 = vpop.f32.mrf.mxu0
        %v1572 = vadd.f32 %v1145, %v1571
        %1573 = vmatprep.mubr.f32.mxu0 0.0
        %1574 = vmatmul.mubr.f32.gmra.mxu0 %v851
        %v1575 = vpop.f32.mrf.mxu0
        %v1576 = vadd.f32 %v1150, %v1575
        %v1577 = vpop.f32.mrf.mxu0
        %v1578 = vadd.f32 %v1150, %v1577
        %1579 = vmatprep.mubr.f32.mxu0 0.0
        %1580 = vmatmul.mubr.f32.gmra.mxu0 %v852
        %v1581 = vpop.f32.mrf.mxu0
        %v1582 = vadd.f32 %v1155, %v1581
        %v1583 = vpop.f32.mrf.mxu0
        %v1584 = vadd.f32 %v1155, %v1583
        %1585 = vmatprep.mubr.f32.mxu0 0.0
        %1586 = vmatmul.mubr.f32.gmra.mxu0 %v853
        %v1587 = vpop.f32.mrf.mxu0
        %v1588 = vadd.f32 %v1160, %v1587
        %v1589 = vpop.f32.mrf.mxu0
        %v1590 = vadd.f32 %v1160, %v1589
        %1591 = vmatprep.mubr.f32.mxu0 0.0
        %1592 = vmatmul.mubr.f32.gmra.mxu0 %v854
        %v1593 = vpop.f32.mrf.mxu0
        %v1594 = vadd.f32 %v1165, %v1593
        %v1595 = vpop.f32.mrf.mxu0
        %v1596 = vadd.f32 %v1165, %v1595
        %1597 = vmatprep.mubr.f32.mxu0 0.0
        %1598 = vmatmul.mubr.f32.gmra.mxu0 %v855
        %v1599 = vpop.f32.mrf.mxu0
        %v1600 = vadd.f32 %v1170, %v1599
        %v1601 = vpop.f32.mrf.mxu0
        %v1602 = vadd.f32 %v1170, %v1601
        %1603 = vmatprep.mubr.f32.mxu0 0.0
        %1604 = vmatmul.mubr.f32.gmra.mxu0 %v856
        %v1605 = vpop.f32.mrf.mxu0
        %v1606 = vadd.f32 %v1175, %v1605
        %v1607 = vpop.f32.mrf.mxu0
        %v1608 = vadd.f32 %v1175, %v1607
        %1609 = vmatprep.mubr.f32.mxu0 0.0
        %1610 = vmatmul.mubr.f32.gmra.mxu0 %v857
        %v1611 = vpop.f32.mrf.mxu0
        %v1612 = vadd.f32 %v1180, %v1611
        %v1613 = vpop.f32.mrf.mxu0
        %v1614 = vadd.f32 %v1180, %v1613
        %1615 = vmatprep.mubr.f32.mxu0 0.0
        %1616 = vmatmul.mubr.f32.gmra.mxu0 %v858
        %v1617 = vpop.f32.mrf.mxu0
        %v1618 = vadd.f32 %v1185, %v1617
        %v1619 = vpop.f32.mrf.mxu0
        %v1620 = vadd.f32 %v1185, %v1619
        %1621 = vmatprep.mubr.f32.mxu0 0.0
        %1622 = vmatmul.mubr.f32.gmra.mxu0 %v859
        %v1623 = vpop.f32.mrf.mxu0
        %v1624 = vadd.f32 %v1190, %v1623
        %v1625 = vpop.f32.mrf.mxu0
        %v1626 = vadd.f32 %v1190, %v1625
        %1627 = vmatprep.mubr.f32.mxu0 0.0
        %1628 = vmatmul.mubr.f32.gmra.mxu0 %v860
        %v1629 = vpop.f32.mrf.mxu0
        %v1630 = vadd.f32 %v1195, %v1629
        %v1631 = vpop.f32.mrf.mxu0
        %v1632 = vadd.f32 %v1195, %v1631
        %1633 = vmatprep.mubr.f32.mxu0 0.0
        %1634 = vmatmul.mubr.f32.gmra.mxu0 %v861
        %v1635 = vpop.f32.mrf.mxu0
        %v1636 = vadd.f32 %v1200, %v1635
        %v1637 = vpop.f32.mrf.mxu0
        %v1638 = vadd.f32 %v1200, %v1637
        %1639 = vmatprep.mubr.f32.mxu0 0.0
        %1640 = vmatmul.mubr.f32.gmra.mxu0 %v862
        %v1641 = vpop.f32.mrf.mxu0
        %v1642 = vadd.f32 %v1205, %v1641
        %v1643 = vpop.f32.mrf.mxu0
        %v1644 = vadd.f32 %v1205, %v1643
        %1645 = vmatprep.mubr.f32.mxu0 0.0
        %1646 = vmatmul.mubr.f32.gmra.mxu0 %v863
        %v1647 = vpop.f32.mrf.mxu0
        %v1648 = vadd.f32 %v1210, %v1647
        %v1649 = vpop.f32.mrf.mxu0
        %v1650 = vadd.f32 %v1210, %v1649
        %1651 = vmatprep.mubr.f32.mxu0 0.0
        %1652 = vmatmul.mubr.f32.gmra.mxu0 %v864
        %v1653 = vpop.f32.mrf.mxu0
        %v1654 = vadd.f32 %v1215, %v1653
        %v1655 = vpop.f32.mrf.mxu0
        %v1656 = vadd.f32 %v1215, %v1655
        %1657 = vmatprep.mubr.f32.mxu0 0.0
        %1658 = vmatmul.mubr.f32.gmra.mxu0 %v865
        %v1659 = vpop.f32.mrf.mxu0
        %v1660 = vadd.f32 %v1220, %v1659
        %v1661 = vpop.f32.mrf.mxu0
        %v1662 = vadd.f32 %v1220, %v1661
        %1663 = vmatprep.mubr.f32.mxu0 0.0
        %1664 = vmatmul.mubr.f32.gmra.mxu0 %v866
        %v1665 = vpop.f32.mrf.mxu0
        %v1666 = vadd.f32 %v1225, %v1665
        %v1667 = vpop.f32.mrf.mxu0
        %v1668 = vadd.f32 %v1225, %v1667
        %1669 = vmatprep.mubr.f32.mxu0 0.0
        %1670 = vmatmul.mubr.f32.gmra.mxu0 %v867
        %v1671 = vpop.f32.mrf.mxu0
        %v1672 = vadd.f32 %v1230, %v1671
        %v1673 = vpop.f32.mrf.mxu0
        %v1674 = vadd.f32 %v1230, %v1673
        %1675 = vmatprep.mubr.f32.mxu0 0.0
        %1676 = vmatmul.mubr.f32.gmra.mxu0 %v868
        %v1677 = vpop.f32.mrf.mxu0
        %v1678 = vadd.f32 %v1235, %v1677
        %v1679 = vpop.f32.mrf.mxu0
        %v1680 = vadd.f32 %v1235, %v1679
        %1681 = vmatprep.mubr.f32.mxu0 0.0
        %1682 = vmatmul.mubr.f32.gmra.mxu0 %v869
        %v1683 = vpop.f32.mrf.mxu0
        %v1684 = vadd.f32 %v1240, %v1683
        %v1685 = vpop.f32.mrf.mxu0
        %v1686 = vadd.f32 %v1240, %v1685
        %1687 = vmatprep.mubr.f32.mxu0 0.0
        %1688 = vmatmul.mubr.f32.gmra.mxu0 %v870
        %v1689 = vpop.f32.mrf.mxu0
        %v1690 = vadd.f32 %v1245, %v1689
        %v1691 = vpop.f32.mrf.mxu0
        %v1692 = vadd.f32 %v1245, %v1691
        %1693 = vmatprep.mubr.f32.mxu0 0.0
        %1694 = vmatmul.mubr.f32.gmra.mxu0 %v871
        %v1695 = vpop.f32.mrf.mxu0
        %v1696 = vadd.f32 %v1250, %v1695
        %v1697 = vpop.f32.mrf.mxu0
        %v1698 = vadd.f32 %v1250, %v1697
        %1699 = vmatprep.mubr.f32.mxu0 0.0
        %1700 = vmatmul.mubr.f32.gmra.mxu0 %v872
        %v1701 = vpop.f32.mrf.mxu0
        %v1702 = vadd.f32 %v1255, %v1701
        %v1703 = vpop.f32.mrf.mxu0
        %v1704 = vadd.f32 %v1255, %v1703
        %1705 = vdwg.mxu0
        %v1706 = vmul.f32 %v1324, 0.5
        %v1707 = vmul.f32 %v1326, 0.5
        %v1708 = vmul.f32 %v1330, 0.5
        %v1709 = vmul.f32 %v1332, 0.5
        %v1710 = vmul.f32 %v1336, 0.5
        %v1711 = vmul.f32 %v1338, 0.5
        %v1712 = vmul.f32 %v1342, 0.5
        %v1713 = vmul.f32 %v1344, 0.5
        %v1714 = vmul.f32 %v1348, 0.5
        %v1715 = vmul.f32 %v1350, 0.5
        %v1716 = vmul.f32 %v1354, 0.5
        %v1717 = vmul.f32 %v1356, 0.5
        %v1718 = vmul.f32 %v1360, 0.5
        %v1719 = vmul.f32 %v1362, 0.5
        %v1720 = vmul.f32 %v1366, 0.5
        %v1721 = vmul.f32 %v1368, 0.5
        %v1722 = vmul.f32 %v1372, 0.5
        %v1723 = vmul.f32 %v1374, 0.5
        %v1724 = vmul.f32 %v1378, 0.5
        %v1725 = vmul.f32 %v1380, 0.5
        %v1726 = vmul.f32 %v1384, 0.5
        %v1727 = vmul.f32 %v1386, 0.5
        %v1728 = vmul.f32 %v1390, 0.5
        %v1729 = vmul.f32 %v1392, 0.5
        %v1730 = vmul.f32 %v1396, 0.5
        %v1731 = vmul.f32 %v1398, 0.5
        %v1732 = vmul.f32 %v1402, 0.5
        %v1733 = vmul.f32 %v1404, 0.5
        %v1734 = vmul.f32 %v1408, 0.5
        %v1735 = vmul.f32 %v1410, 0.5
        %v1736 = vmul.f32 %v1414, 0.5
        %v1737 = vmul.f32 %v1416, 0.5
        %v1738 = vmul.f32 %v1420, 0.5
        %v1739 = vmul.f32 %v1422, 0.5
        %v1740 = vmul.f32 %v1426, 0.5
        %v1741 = vmul.f32 %v1428, 0.5
        %v1742 = vmul.f32 %v1432, 0.5
        %v1743 = vmul.f32 %v1434, 0.5
        %v1744 = vmul.f32 %v1438, 0.5
        %v1745 = vmul.f32 %v1440, 0.5
        %v1746 = vmul.f32 %v1444, 0.5
        %v1747 = vmul.f32 %v1446, 0.5
        %v1748 = vmul.f32 %v1450, 0.5
        %v1749 = vmul.f32 %v1452, 0.5
        %v1750 = vmul.f32 %v1456, 0.5
        %v1751 = vmul.f32 %v1458, 0.5
        %v1752 = vmul.f32 %v1462, 0.5
        %v1753 = vmul.f32 %v1464, 0.5
        %v1754 = vmul.f32 %v1468, 0.5
        %v1755 = vmul.f32 %v1470, 0.5
        %v1756 = vmul.f32 %v1474, 0.5
        %v1757 = vmul.f32 %v1476, 0.5
        %v1758 = vmul.f32 %v1480, 0.5
        %v1759 = vmul.f32 %v1482, 0.5
        %v1760 = vmul.f32 %v1486, 0.5
        %v1761 = vmul.f32 %v1488, 0.5
        %v1762 = vmul.f32 %v1492, 0.5
        %v1763 = vmul.f32 %v1494, 0.5
        %v1764 = vmul.f32 %v1498, 0.5
        %v1765 = vmul.f32 %v1500, 0.5
        %v1766 = vmul.f32 %v1504, 0.5
        %v1767 = vmul.f32 %v1506, 0.5
        %v1768 = vmul.f32 %v1510, 0.5
        %v1769 = vmul.f32 %v1512, 0.5
        %v1770 = vmul.f32 %v1516, 0.5
        %v1771 = vmul.f32 %v1518, 0.5
        %v1772 = vmul.f32 %v1522, 0.5
        %v1773 = vmul.f32 %v1524, 0.5
        %v1774 = vmul.f32 %v1528, 0.5
        %v1775 = vmul.f32 %v1530, 0.5
        %v1776 = vmul.f32 %v1534, 0.5
        %v1777 = vmul.f32 %v1536, 0.5
        %v1778 = vmul.f32 %v1540, 0.5
        %v1779 = vmul.f32 %v1542, 0.5
        %v1780 = vmul.f32 %v1546, 0.5
        %v1781 = vmul.f32 %v1548, 0.5
        %v1782 = vmul.f32 %v1552, 0.5
        %v1783 = vmul.f32 %v1554, 0.5
        %v1784 = vmul.f32 %v1558, 0.5
        %v1785 = vmul.f32 %v1560, 0.5
        %v1786 = vmul.f32 %v1564, 0.5
        %v1787 = vmul.f32 %v1566, 0.5
        %v1788 = vmul.f32 %v1570, 0.5
        %v1789 = vmul.f32 %v1572, 0.5
        %v1790 = vmul.f32 %v1576, 0.5
        %v1791 = vmul.f32 %v1578, 0.5
        %v1792 = vmul.f32 %v1582, 0.5
        %v1793 = vmul.f32 %v1584, 0.5
        %v1794 = vmul.f32 %v1588, 0.5
        %v1795 = vmul.f32 %v1590, 0.5
        %v1796 = vmul.f32 %v1594, 0.5
        %v1797 = vmul.f32 %v1596, 0.5
        %v1798 = vmul.f32 %v1600, 0.5
        %v1799 = vmul.f32 %v1602, 0.5
        %v1800 = vmul.f32 %v1606, 0.5
        %v1801 = vmul.f32 %v1608, 0.5
        %v1802 = vmul.f32 %v1612, 0.5
        %v1803 = vmul.f32 %v1614, 0.5
        %v1804 = vmul.f32 %v1618, 0.5
        %v1805 = vmul.f32 %v1620, 0.5
        %v1806 = vmul.f32 %v1624, 0.5
        %v1807 = vmul.f32 %v1626, 0.5
        %v1808 = vmul.f32 %v1630, 0.5
        %v1809 = vmul.f32 %v1632, 0.5
        %v1810 = vmul.f32 %v1636, 0.5
        %v1811 = vmul.f32 %v1638, 0.5
        %v1812 = vmul.f32 %v1642, 0.5
        %v1813 = vmul.f32 %v1644, 0.5
        %v1814 = vmul.f32 %v1648, 0.5
        %v1815 = vmul.f32 %v1650, 0.5
        %v1816 = vmul.f32 %v1654, 0.5
        %v1817 = vmul.f32 %v1656, 0.5
        %v1818 = vmul.f32 %v1660, 0.5
        %v1819 = vmul.f32 %v1662, 0.5
        %v1820 = vmul.f32 %v1666, 0.5
        %v1821 = vmul.f32 %v1668, 0.5
        %v1822 = vmul.f32 %v1672, 0.5
        %v1823 = vmul.f32 %v1674, 0.5
        %v1824 = vmul.f32 %v1678, 0.5
        %v1825 = vmul.f32 %v1680, 0.5
        %v1826 = vmul.f32 %v1684, 0.5
        %v1827 = vmul.f32 %v1686, 0.5
        %v1828 = vmul.f32 %v1690, 0.5
        %v1829 = vmul.f32 %v1692, 0.5
        %v1830 = vmul.f32 %v1696, 0.5
        %v1831 = vmul.f32 %v1698, 0.5
        %v1832 = vmul.f32 %v1702, 0.5
        %v1833 = vmul.f32 %v1704, 0.5
        %v1834 = vmul.f32 %v1324, 0.70710677
        %v1835 = vmul.f32 %v1326, 0.70710677
        %v1836 = vmul.f32 %v1330, 0.70710677
        %v1837 = vmul.f32 %v1332, 0.70710677
        %v1838 = vmul.f32 %v1336, 0.70710677
        %v1839 = vmul.f32 %v1338, 0.70710677
        %v1840 = vmul.f32 %v1342, 0.70710677
        %v1841 = vmul.f32 %v1344, 0.70710677
        %v1842 = vmul.f32 %v1348, 0.70710677
        %v1843 = vmul.f32 %v1350, 0.70710677
        %v1844 = vmul.f32 %v1354, 0.70710677
        %v1845 = vmul.f32 %v1356, 0.70710677
        %v1846 = vmul.f32 %v1360, 0.70710677
        %v1847 = vmul.f32 %v1362, 0.70710677
        %v1848 = vmul.f32 %v1366, 0.70710677
        %v1849 = vmul.f32 %v1368, 0.70710677
        %v1850 = vmul.f32 %v1372, 0.70710677
        %v1851 = vmul.f32 %v1374, 0.70710677
        %v1852 = vmul.f32 %v1378, 0.70710677
        %v1853 = vmul.f32 %v1380, 0.70710677
        %v1854 = vmul.f32 %v1384, 0.70710677
        %v1855 = vmul.f32 %v1386, 0.70710677
        %v1856 = vmul.f32 %v1390, 0.70710677
        %v1857 = vmul.f32 %v1392, 0.70710677
        %v1858 = vmul.f32 %v1396, 0.70710677
        %v1859 = vmul.f32 %v1398, 0.70710677
        %v1860 = vmul.f32 %v1402, 0.70710677
        %v1861 = vmul.f32 %v1404, 0.70710677
        %v1862 = vmul.f32 %v1408, 0.70710677
        %v1863 = vmul.f32 %v1410, 0.70710677
        %v1864 = vmul.f32 %v1414, 0.70710677
        %v1865 = vmul.f32 %v1416, 0.70710677
        %v1866 = vmul.f32 %v1420, 0.70710677
        %v1867 = vmul.f32 %v1422, 0.70710677
        %v1868 = vmul.f32 %v1426, 0.70710677
        %v1869 = vmul.f32 %v1428, 0.70710677
        %v1870 = vmul.f32 %v1432, 0.70710677
        %v1871 = vmul.f32 %v1434, 0.70710677
        %v1872 = vmul.f32 %v1438, 0.70710677
        %v1873 = vmul.f32 %v1440, 0.70710677
        %v1874 = vmul.f32 %v1444, 0.70710677
        %v1875 = vmul.f32 %v1446, 0.70710677
        %v1876 = vmul.f32 %v1450, 0.70710677
        %v1877 = vmul.f32 %v1452, 0.70710677
        %v1878 = vmul.f32 %v1456, 0.70710677
        %v1879 = vmul.f32 %v1458, 0.70710677
        %v1880 = vmul.f32 %v1462, 0.70710677
        %v1881 = vmul.f32 %v1464, 0.70710677
        %v1882 = vmul.f32 %v1468, 0.70710677
        %v1883 = vmul.f32 %v1470, 0.70710677
        %v1884 = vmul.f32 %v1474, 0.70710677
        %v1885 = vmul.f32 %v1476, 0.70710677
        %v1886 = vmul.f32 %v1480, 0.70710677
        %v1887 = vmul.f32 %v1482, 0.70710677
        %v1888 = vmul.f32 %v1486, 0.70710677
        %v1889 = vmul.f32 %v1488, 0.70710677
        %v1890 = vmul.f32 %v1492, 0.70710677
        %v1891 = vmul.f32 %v1494, 0.70710677
        %v1892 = vmul.f32 %v1498, 0.70710677
        %v1893 = vmul.f32 %v1500, 0.70710677
        %v1894 = vmul.f32 %v1504, 0.70710677
        %v1895 = vmul.f32 %v1506, 0.70710677
        %v1896 = vmul.f32 %v1510, 0.70710677
        %v1897 = vmul.f32 %v1512, 0.70710677
        %v1898 = vmul.f32 %v1516, 0.70710677
        %v1899 = vmul.f32 %v1518, 0.70710677
        %v1900 = vmul.f32 %v1522, 0.70710677
        %v1901 = vmul.f32 %v1524, 0.70710677
        %v1902 = vmul.f32 %v1528, 0.70710677
        %v1903 = vmul.f32 %v1530, 0.70710677
        %v1904 = vmul.f32 %v1534, 0.70710677
        %v1905 = vmul.f32 %v1536, 0.70710677
        %v1906 = vmul.f32 %v1540, 0.70710677
        %v1907 = vmul.f32 %v1542, 0.70710677
        %v1908 = vmul.f32 %v1546, 0.70710677
        %v1909 = vmul.f32 %v1548, 0.70710677
        %v1910 = vmul.f32 %v1552, 0.70710677
        %v1911 = vmul.f32 %v1554, 0.70710677
        %v1912 = vmul.f32 %v1558, 0.70710677
        %v1913 = vmul.f32 %v1560, 0.70710677
        %v1914 = vmul.f32 %v1564, 0.70710677
        %v1915 = vmul.f32 %v1566, 0.70710677
        %v1916 = vmul.f32 %v1570, 0.70710677
        %v1917 = vmul.f32 %v1572, 0.70710677
        %v1918 = vmul.f32 %v1576, 0.70710677
        %v1919 = vmul.f32 %v1578, 0.70710677
        %v1920 = vmul.f32 %v1582, 0.70710677
        %v1921 = vmul.f32 %v1584, 0.70710677
        %v1922 = vmul.f32 %v1588, 0.70710677
        %v1923 = vmul.f32 %v1590, 0.70710677
        %v1924 = vmul.f32 %v1594, 0.70710677
        %v1925 = vmul.f32 %v1596, 0.70710677
        %v1926 = vmul.f32 %v1600, 0.70710677
        %v1927 = vmul.f32 %v1602, 0.70710677
        %v1928 = vmul.f32 %v1606, 0.70710677
        %v1929 = vmul.f32 %v1608, 0.70710677
        %v1930 = vmul.f32 %v1612, 0.70710677
        %v1931 = vmul.f32 %v1614, 0.70710677
        %v1932 = vmul.f32 %v1618, 0.70710677
        %v1933 = vmul.f32 %v1620, 0.70710677
        %v1934 = vmul.f32 %v1624, 0.70710677
        %v1935 = vmul.f32 %v1626, 0.70710677
        %v1936 = vmul.f32 %v1630, 0.70710677
        %v1937 = vmul.f32 %v1632, 0.70710677
        %v1938 = vmul.f32 %v1636, 0.70710677
        %v1939 = vmul.f32 %v1638, 0.70710677
        %v1940 = vmul.f32 %v1642, 0.70710677
        %v1941 = vmul.f32 %v1644, 0.70710677
        %v1942 = vmul.f32 %v1648, 0.70710677
        %v1943 = vmul.f32 %v1650, 0.70710677
        %v1944 = vmul.f32 %v1654, 0.70710677
        %v1945 = vmul.f32 %v1656, 0.70710677
        %v1946 = vmul.f32 %v1660, 0.70710677
        %v1947 = vmul.f32 %v1662, 0.70710677
        %v1948 = vmul.f32 %v1666, 0.70710677
        %v1949 = vmul.f32 %v1668, 0.70710677
        %v1950 = vmul.f32 %v1672, 0.70710677
        %v1951 = vmul.f32 %v1674, 0.70710677
        %v1952 = vmul.f32 %v1678, 0.70710677
        %v1953 = vmul.f32 %v1680, 0.70710677
        %v1954 = vmul.f32 %v1684, 0.70710677
        %v1955 = vmul.f32 %v1686, 0.70710677
        %v1956 = vmul.f32 %v1690, 0.70710677
        %v1957 = vmul.f32 %v1692, 0.70710677
        %v1958 = vmul.f32 %v1696, 0.70710677
        %v1959 = vmul.f32 %v1698, 0.70710677
        %v1960 = vmul.f32 %v1702, 0.70710677
        %v1961 = vmul.f32 %v1704, 0.70710677
        %v1962 = verf.f32.pop %v1834
        %v1963 = verf.f32.pop %v1835
        %v1964 = verf.f32.pop %v1836
        %v1965 = verf.f32.pop %v1837
        %v1966 = verf.f32.pop %v1838
        %v1967 = verf.f32.pop %v1839
        %v1968 = verf.f32.pop %v1840
        %v1969 = verf.f32.pop %v1841
        %v1970 = verf.f32.pop %v1842
        %v1971 = verf.f32.pop %v1843
        %v1972 = verf.f32.pop %v1844
        %v1973 = verf.f32.pop %v1845
        %v1974 = verf.f32.pop %v1846
        %v1975 = verf.f32.pop %v1847
        %v1976 = verf.f32.pop %v1848
        %v1977 = verf.f32.pop %v1849
        %v1978 = verf.f32.pop %v1850
        %v1979 = verf.f32.pop %v1851
        %v1980 = verf.f32.pop %v1852
        %v1981 = verf.f32.pop %v1853
        %v1982 = verf.f32.pop %v1854
        %v1983 = verf.f32.pop %v1855
        %v1984 = verf.f32.pop %v1856
        %v1985 = verf.f32.pop %v1857
        %v1986 = verf.f32.pop %v1858
        %v1987 = verf.f32.pop %v1859
        %v1988 = verf.f32.pop %v1860
        %v1989 = verf.f32.pop %v1861
        %v1990 = verf.f32.pop %v1862
        %v1991 = verf.f32.pop %v1863
        %v1992 = verf.f32.pop %v1864
        %v1993 = verf.f32.pop %v1865
        %v1994 = verf.f32.pop %v1866
        %v1995 = verf.f32.pop %v1867
        %v1996 = verf.f32.pop %v1868
        %v1997 = verf.f32.pop %v1869
        %v1998 = verf.f32.pop %v1870
        %v1999 = verf.f32.pop %v1871
        %v2000 = verf.f32.pop %v1872
        %v2001 = verf.f32.pop %v1873
        %v2002 = verf.f32.pop %v1874
        %v2003 = verf.f32.pop %v1875
        %v2004 = verf.f32.pop %v1876
        %v2005 = verf.f32.pop %v1877
        %v2006 = verf.f32.pop %v1878
        %v2007 = verf.f32.pop %v1879
        %v2008 = verf.f32.pop %v1880
        %v2009 = verf.f32.pop %v1881
        %v2010 = verf.f32.pop %v1882
        %v2011 = verf.f32.pop %v1883
        %v2012 = verf.f32.pop %v1884
        %v2013 = verf.f32.pop %v1885
        %v2014 = verf.f32.pop %v1886
        %v2015 = verf.f32.pop %v1887
        %v2016 = verf.f32.pop %v1888
        %v2017 = verf.f32.pop %v1889
        %v2018 = verf.f32.pop %v1890
        %v2019 = verf.f32.pop %v1891
        %v2020 = verf.f32.pop %v1892
        %v2021 = verf.f32.pop %v1893
        %v2022 = verf.f32.pop %v1894
        %v2023 = verf.f32.pop %v1895
        %v2024 = verf.f32.pop %v1896
        %v2025 = verf.f32.pop %v1897
        %v2026 = verf.f32.pop %v1898
        %v2027 = verf.f32.pop %v1899
        %v2028 = verf.f32.pop %v1900
        %v2029 = verf.f32.pop %v1901
        %v2030 = verf.f32.pop %v1902
        %v2031 = verf.f32.pop %v1903
        %v2032 = verf.f32.pop %v1904
        %v2033 = verf.f32.pop %v1905
        %v2034 = verf.f32.pop %v1906
        %v2035 = verf.f32.pop %v1907
        %v2036 = verf.f32.pop %v1908
        %v2037 = verf.f32.pop %v1909
        %v2038 = verf.f32.pop %v1910
        %v2039 = verf.f32.pop %v1911
        %v2040 = verf.f32.pop %v1912
        %v2041 = verf.f32.pop %v1913
        %v2042 = verf.f32.pop %v1914
        %v2043 = verf.f32.pop %v1915
        %v2044 = verf.f32.pop %v1916
        %v2045 = verf.f32.pop %v1917
        %v2046 = verf.f32.pop %v1918
        %v2047 = verf.f32.pop %v1919
        %v2048 = verf.f32.pop %v1920
        %v2049 = verf.f32.pop %v1921
        %v2050 = verf.f32.pop %v1922
        %v2051 = verf.f32.pop %v1923
        %v2052 = verf.f32.pop %v1924
        %v2053 = verf.f32.pop %v1925
        %v2054 = verf.f32.pop %v1926
        %v2055 = verf.f32.pop %v1927
        %v2056 = verf.f32.pop %v1928
        %v2057 = verf.f32.pop %v1929
        %v2058 = verf.f32.pop %v1930
        %v2059 = verf.f32.pop %v1931
        %v2060 = verf.f32.pop %v1932
        %v2061 = verf.f32.pop %v1933
        %v2062 = verf.f32.pop %v1934
        %v2063 = verf.f32.pop %v1935
        %v2064 = verf.f32.pop %v1936
        %v2065 = verf.f32.pop %v1937
        %v2066 = verf.f32.pop %v1938
        %v2067 = verf.f32.pop %v1939
        %v2068 = verf.f32.pop %v1940
        %v2069 = verf.f32.pop %v1941
        %v2070 = verf.f32.pop %v1942
        %v2071 = verf.f32.pop %v1943
        %v2072 = verf.f32.pop %v1944
        %v2073 = verf.f32.pop %v1945
        %v2074 = verf.f32.pop %v1946
        %v2075 = verf.f32.pop %v1947
        %v2076 = verf.f32.pop %v1948
        %v2077 = verf.f32.pop %v1949
        %v2078 = verf.f32.pop %v1950
        %v2079 = verf.f32.pop %v1951
        %v2080 = verf.f32.pop %v1952
        %v2081 = verf.f32.pop %v1953
        %v2082 = verf.f32.pop %v1954
        %v2083 = verf.f32.pop %v1955
        %v2084 = verf.f32.pop %v1956
        %v2085 = verf.f32.pop %v1957
        %v2086 = verf.f32.pop %v1958
        %v2087 = verf.f32.pop %v1959
        %v2088 = verf.f32.pop %v1960
        %v2089 = verf.f32.pop %v1961
        %v2090 = vadd.f32 %v1962, 1.0
        %v2091 = vadd.f32 %v1963, 1.0
        %v2092 = vadd.f32 %v1964, 1.0
        %v2093 = vadd.f32 %v1965, 1.0
        %v2094 = vadd.f32 %v1966, 1.0
        %v2095 = vadd.f32 %v1967, 1.0
        %v2096 = vadd.f32 %v1968, 1.0
        %v2097 = vadd.f32 %v1969, 1.0
        %v2098 = vadd.f32 %v1970, 1.0
        %v2099 = vadd.f32 %v1971, 1.0
        %v2100 = vadd.f32 %v1972, 1.0
        %v2101 = vadd.f32 %v1973, 1.0
        %v2102 = vadd.f32 %v1974, 1.0
        %v2103 = vadd.f32 %v1975, 1.0
        %v2104 = vadd.f32 %v1976, 1.0
        %v2105 = vadd.f32 %v1977, 1.0
        %v2106 = vadd.f32 %v1978, 1.0
        %v2107 = vadd.f32 %v1979, 1.0
        %v2108 = vadd.f32 %v1980, 1.0
        %v2109 = vadd.f32 %v1981, 1.0
        %v2110 = vadd.f32 %v1982, 1.0
        %v2111 = vadd.f32 %v1983, 1.0
        %v2112 = vadd.f32 %v1984, 1.0
        %v2113 = vadd.f32 %v1985, 1.0
        %v2114 = vadd.f32 %v1986, 1.0
        %v2115 = vadd.f32 %v1987, 1.0
        %v2116 = vadd.f32 %v1988, 1.0
        %v2117 = vadd.f32 %v1989, 1.0
        %v2118 = vadd.f32 %v1990, 1.0
        %v2119 = vadd.f32 %v1991, 1.0
        %v2120 = vadd.f32 %v1992, 1.0
        %v2121 = vadd.f32 %v1993, 1.0
        %v2122 = vadd.f32 %v1994, 1.0
        %v2123 = vadd.f32 %v1995, 1.0
        %v2124 = vadd.f32 %v1996, 1.0
        %v2125 = vadd.f32 %v1997, 1.0
        %v2126 = vadd.f32 %v1998, 1.0
        %v2127 = vadd.f32 %v1999, 1.0
        %v2128 = vadd.f32 %v2000, 1.0
        %v2129 = vadd.f32 %v2001, 1.0
        %v2130 = vadd.f32 %v2002, 1.0
        %v2131 = vadd.f32 %v2003, 1.0
        %v2132 = vadd.f32 %v2004, 1.0
        %v2133 = vadd.f32 %v2005, 1.0
        %v2134 = vadd.f32 %v2006, 1.0
        %v2135 = vadd.f32 %v2007, 1.0
        %v2136 = vadd.f32 %v2008, 1.0
        %v2137 = vadd.f32 %v2009, 1.0
        %v2138 = vadd.f32 %v2010, 1.0
        %v2139 = vadd.f32 %v2011, 1.0
        %v2140 = vadd.f32 %v2012, 1.0
        %v2141 = vadd.f32 %v2013, 1.0
        %v2142 = vadd.f32 %v2014, 1.0
        %v2143 = vadd.f32 %v2015, 1.0
        %v2144 = vadd.f32 %v2016, 1.0
        %v2145 = vadd.f32 %v2017, 1.0
        %v2146 = vadd.f32 %v2018, 1.0
        %v2147 = vadd.f32 %v2019, 1.0
        %v2148 = vadd.f32 %v2020, 1.0
        %v2149 = vadd.f32 %v2021, 1.0
        %v2150 = vadd.f32 %v2022, 1.0
        %v2151 = vadd.f32 %v2023, 1.0
        %v2152 = vadd.f32 %v2024, 1.0
        %v2153 = vadd.f32 %v2025, 1.0
        %v2154 = vadd.f32 %v2026, 1.0
        %v2155 = vadd.f32 %v2027, 1.0
        %v2156 = vadd.f32 %v2028, 1.0
        %v2157 = vadd.f32 %v2029, 1.0
        %v2158 = vadd.f32 %v2030, 1.0
        %v2159 = vadd.f32 %v2031, 1.0
        %v2160 = vadd.f32 %v2032, 1.0
        %v2161 = vadd.f32 %v2033, 1.0
        %v2162 = vadd.f32 %v2034, 1.0
        %v2163 = vadd.f32 %v2035, 1.0
        %v2164 = vadd.f32 %v2036, 1.0
        %v2165 = vadd.f32 %v2037, 1.0
        %v2166 = vadd.f32 %v2038, 1.0
        %v2167 = vadd.f32 %v2039, 1.0
        %v2168 = vadd.f32 %v2040, 1.0
        %v2169 = vadd.f32 %v2041, 1.0
        %v2170 = vadd.f32 %v2042, 1.0
        %v2171 = vadd.f32 %v2043, 1.0
        %v2172 = vadd.f32 %v2044, 1.0
        %v2173 = vadd.f32 %v2045, 1.0
        %v2174 = vadd.f32 %v2046, 1.0
        %v2175 = vadd.f32 %v2047, 1.0
        %v2176 = vadd.f32 %v2048, 1.0
        %v2177 = vadd.f32 %v2049, 1.0
        %v2178 = vadd.f32 %v2050, 1.0
        %v2179 = vadd.f32 %v2051, 1.0
        %v2180 = vadd.f32 %v2052, 1.0
        %v2181 = vadd.f32 %v2053, 1.0
        %v2182 = vadd.f32 %v2054, 1.0
        %v2183 = vadd.f32 %v2055, 1.0
        %v2184 = vadd.f32 %v2056, 1.0
        %v2185 = vadd.f32 %v2057, 1.0
        %v2186 = vadd.f32 %v2058, 1.0
        %v2187 = vadd.f32 %v2059, 1.0
        %v2188 = vadd.f32 %v2060, 1.0
        %v2189 = vadd.f32 %v2061, 1.0
        %v2190 = vadd.f32 %v2062, 1.0
        %v2191 = vadd.f32 %v2063, 1.0
        %v2192 = vadd.f32 %v2064, 1.0
        %v2193 = vadd.f32 %v2065, 1.0
        %v2194 = vadd.f32 %v2066, 1.0
        %v2195 = vadd.f32 %v2067, 1.0
        %v2196 = vadd.f32 %v2068, 1.0
        %v2197 = vadd.f32 %v2069, 1.0
        %v2198 = vadd.f32 %v2070, 1.0
        %v2199 = vadd.f32 %v2071, 1.0
        %v2200 = vadd.f32 %v2072, 1.0
        %v2201 = vadd.f32 %v2073, 1.0
        %v2202 = vadd.f32 %v2074, 1.0
        %v2203 = vadd.f32 %v2075, 1.0
        %v2204 = vadd.f32 %v2076, 1.0
        %v2205 = vadd.f32 %v2077, 1.0
        %v2206 = vadd.f32 %v2078, 1.0
        %v2207 = vadd.f32 %v2079, 1.0
        %v2208 = vadd.f32 %v2080, 1.0
        %v2209 = vadd.f32 %v2081, 1.0
        %v2210 = vadd.f32 %v2082, 1.0
        %v2211 = vadd.f32 %v2083, 1.0
        %v2212 = vadd.f32 %v2084, 1.0
        %v2213 = vadd.f32 %v2085, 1.0
        %v2214 = vadd.f32 %v2086, 1.0
        %v2215 = vadd.f32 %v2087, 1.0
        %v2216 = vadd.f32 %v2088, 1.0
        %v2217 = vadd.f32 %v2089, 1.0
        %v2218 = vmul.f32 %v1706, %v2090
        %v2219 = vmul.f32 %v1707, %v2091
        %v2220 = vmul.f32 %v1708, %v2092
        %v2221 = vmul.f32 %v1709, %v2093
        %v2222 = vmul.f32 %v1710, %v2094
        %v2223 = vmul.f32 %v1711, %v2095
        %v2224 = vmul.f32 %v1712, %v2096
        %v2225 = vmul.f32 %v1713, %v2097
        %v2226 = vmul.f32 %v1714, %v2098
        %v2227 = vmul.f32 %v1715, %v2099
        %v2228 = vmul.f32 %v1716, %v2100
        %v2229 = vmul.f32 %v1717, %v2101
        %v2230 = vmul.f32 %v1718, %v2102
        %v2231 = vmul.f32 %v1719, %v2103
        %v2232 = vmul.f32 %v1720, %v2104
        %v2233 = vmul.f32 %v1721, %v2105
        %v2234 = vmul.f32 %v1722, %v2106
        %v2235 = vmul.f32 %v1723, %v2107
        %v2236 = vmul.f32 %v1724, %v2108
        %v2237 = vmul.f32 %v1725, %v2109
        %v2238 = vmul.f32 %v1726, %v2110
        %v2239 = vmul.f32 %v1727, %v2111
        %v2240 = vmul.f32 %v1728, %v2112
        %v2241 = vmul.f32 %v1729, %v2113
        %v2242 = vmul.f32 %v1730, %v2114
        %v2243 = vmul.f32 %v1731, %v2115
        %v2244 = vmul.f32 %v1732, %v2116
        %v2245 = vmul.f32 %v1733, %v2117
        %v2246 = vmul.f32 %v1734, %v2118
        %v2247 = vmul.f32 %v1735, %v2119
        %v2248 = vmul.f32 %v1736, %v2120
        %v2249 = vmul.f32 %v1737, %v2121
        %v2250 = vmul.f32 %v1738, %v2122
        %v2251 = vmul.f32 %v1739, %v2123
        %v2252 = vmul.f32 %v1740, %v2124
        %v2253 = vmul.f32 %v1741, %v2125
        %v2254 = vmul.f32 %v1742, %v2126
        %v2255 = vmul.f32 %v1743, %v2127
        %v2256 = vmul.f32 %v1744, %v2128
        %v2257 = vmul.f32 %v1745, %v2129
        %v2258 = vmul.f32 %v1746, %v2130
        %v2259 = vmul.f32 %v1747, %v2131
        %v2260 = vmul.f32 %v1748, %v2132
        %v2261 = vmul.f32 %v1749, %v2133
        %v2262 = vmul.f32 %v1750, %v2134
        %v2263 = vmul.f32 %v1751, %v2135
        %v2264 = vmul.f32 %v1752, %v2136
        %v2265 = vmul.f32 %v1753, %v2137
        %v2266 = vmul.f32 %v1754, %v2138
        %v2267 = vmul.f32 %v1755, %v2139
        %v2268 = vmul.f32 %v1756, %v2140
        %v2269 = vmul.f32 %v1757, %v2141
        %v2270 = vmul.f32 %v1758, %v2142
        %v2271 = vmul.f32 %v1759, %v2143
        %v2272 = vmul.f32 %v1760, %v2144
        %v2273 = vmul.f32 %v1761, %v2145
        %v2274 = vmul.f32 %v1762, %v2146
        %v2275 = vmul.f32 %v1763, %v2147
        %v2276 = vmul.f32 %v1764, %v2148
        %v2277 = vmul.f32 %v1765, %v2149
        %v2278 = vmul.f32 %v1766, %v2150
        %v2279 = vmul.f32 %v1767, %v2151
        %v2280 = vmul.f32 %v1768, %v2152
        %v2281 = vmul.f32 %v1769, %v2153
        %v2282 = vmul.f32 %v1770, %v2154
        %v2283 = vmul.f32 %v1771, %v2155
        %v2284 = vmul.f32 %v1772, %v2156
        %v2285 = vmul.f32 %v1773, %v2157
        %v2286 = vmul.f32 %v1774, %v2158
        %v2287 = vmul.f32 %v1775, %v2159
        %v2288 = vmul.f32 %v1776, %v2160
        %v2289 = vmul.f32 %v1777, %v2161
        %v2290 = vmul.f32 %v1778, %v2162
        %v2291 = vmul.f32 %v1779, %v2163
        %v2292 = vmul.f32 %v1780, %v2164
        %v2293 = vmul.f32 %v1781, %v2165
        %v2294 = vmul.f32 %v1782, %v2166
        %v2295 = vmul.f32 %v1783, %v2167
        %v2296 = vmul.f32 %v1784, %v2168
        %v2297 = vmul.f32 %v1785, %v2169
        %v2298 = vmul.f32 %v1786, %v2170
        %v2299 = vmul.f32 %v1787, %v2171
        %v2300 = vmul.f32 %v1788, %v2172
        %v2301 = vmul.f32 %v1789, %v2173
        %v2302 = vmul.f32 %v1790, %v2174
        %v2303 = vmul.f32 %v1791, %v2175
        %v2304 = vmul.f32 %v1792, %v2176
        %v2305 = vmul.f32 %v1793, %v2177
        %v2306 = vmul.f32 %v1794, %v2178
        %v2307 = vmul.f32 %v1795, %v2179
        %v2308 = vmul.f32 %v1796, %v2180
        %v2309 = vmul.f32 %v1797, %v2181
        %v2310 = vmul.f32 %v1798, %v2182
        %v2311 = vmul.f32 %v1799, %v2183
        %v2312 = vmul.f32 %v1800, %v2184
        %v2313 = vmul.f32 %v1801, %v2185
        %v2314 = vmul.f32 %v1802, %v2186
        %v2315 = vmul.f32 %v1803, %v2187
        %v2316 = vmul.f32 %v1804, %v2188
        %v2317 = vmul.f32 %v1805, %v2189
        %v2318 = vmul.f32 %v1806, %v2190
        %v2319 = vmul.f32 %v1807, %v2191
        %v2320 = vmul.f32 %v1808, %v2192
        %v2321 = vmul.f32 %v1809, %v2193
        %v2322 = vmul.f32 %v1810, %v2194
        %v2323 = vmul.f32 %v1811, %v2195
        %v2324 = vmul.f32 %v1812, %v2196
        %v2325 = vmul.f32 %v1813, %v2197
        %v2326 = vmul.f32 %v1814, %v2198
        %v2327 = vmul.f32 %v1815, %v2199
        %v2328 = vmul.f32 %v1816, %v2200
        %v2329 = vmul.f32 %v1817, %v2201
        %v2330 = vmul.f32 %v1818, %v2202
        %v2331 = vmul.f32 %v1819, %v2203
        %v2332 = vmul.f32 %v1820, %v2204
        %v2333 = vmul.f32 %v1821, %v2205
        %v2334 = vmul.f32 %v1822, %v2206
        %v2335 = vmul.f32 %v1823, %v2207
        %v2336 = vmul.f32 %v1824, %v2208
        %v2337 = vmul.f32 %v1825, %v2209
        %v2338 = vmul.f32 %v1826, %v2210
        %v2339 = vmul.f32 %v1827, %v2211
        %v2340 = vmul.f32 %v1828, %v2212
        %v2341 = vmul.f32 %v1829, %v2213
        %v2342 = vmul.f32 %v1830, %v2214
        %v2343 = vmul.f32 %v1831, %v2215
        %v2344 = vmul.f32 %v1832, %v2216
        %v2345 = vmul.f32 %v1833, %v2217
        %v2346 = vld [vmem:[#allocation5] sm:$0xff]
        %v2347 = vld [vmem:[#allocation5 + $0x8] sm:$0xff]
        %v2348 = vld [vmem:[#allocation5 + $0x10] sm:$0xff]
        %v2349 = vld [vmem:[#allocation5 + $0x18] sm:$0xff]
        %v2350 = vld [vmem:[#allocation5 + $0x20] sm:$0xff]
        %v2351 = vld [vmem:[#allocation5 + $0x28] sm:$0xff]
        %v2352 = vld [vmem:[#allocation5 + $0x30] sm:$0xff]
        %v2353 = vld [vmem:[#allocation5 + $0x38] sm:$0xff]
        %v2354 = vld [vmem:[#allocation5 + $0x40] sm:$0xff]
        %v2355 = vld [vmem:[#allocation5 + $0x48] sm:$0xff]
        %v2356 = vld [vmem:[#allocation5 + $0x50] sm:$0xff]
        %v2357 = vld [vmem:[#allocation5 + $0x58] sm:$0xff]
        %v2358 = vld [vmem:[#allocation5 + $0x60] sm:$0xff]
        %v2359 = vld [vmem:[#allocation5 + $0x68] sm:$0xff]
        %v2360 = vld [vmem:[#allocation5 + $0x70] sm:$0xff]
        %v2361 = vld [vmem:[#allocation5 + $0x78] sm:$0xff]
        %v2362 = vld [vmem:[#allocation5 + $0x80] sm:$0xff]
        %v2363 = vld [vmem:[#allocation5 + $0x88] sm:$0xff]
        %v2364 = vld [vmem:[#allocation5 + $0x90] sm:$0xff]
        %v2365 = vld [vmem:[#allocation5 + $0x98] sm:$0xff]
        %v2366 = vld [vmem:[#allocation5 + $0xa0] sm:$0xff]
        %v2367 = vld [vmem:[#allocation5 + $0xa8] sm:$0xff]
        %v2368 = vld [vmem:[#allocation5 + $0xb0] sm:$0xff]
        %v2369 = vld [vmem:[#allocation5 + $0xb8] sm:$0xff]
        %v2370 = vld [vmem:[#allocation5 + $0xc0] sm:$0xff]
        %v2371 = vld [vmem:[#allocation5 + $0xc8] sm:$0xff]
        %v2372 = vld [vmem:[#allocation5 + $0xd0] sm:$0xff]
        %v2373 = vld [vmem:[#allocation5 + $0xd8] sm:$0xff]
        %v2374 = vld [vmem:[#allocation5 + $0xe0] sm:$0xff]
        %v2375 = vld [vmem:[#allocation5 + $0xe8] sm:$0xff]
        %v2376 = vld [vmem:[#allocation5 + $0xf0] sm:$0xff]
        %v2377 = vld [vmem:[#allocation5 + $0xf8] sm:$0xff]
        %v2378 = vld [vmem:[#allocation5 + $0x100] sm:$0xff]
        %v2379 = vld [vmem:[#allocation5 + $0x108] sm:$0xff]
        %v2380 = vld [vmem:[#allocation5 + $0x110] sm:$0xff]
        %v2381 = vld [vmem:[#allocation5 + $0x118] sm:$0xff]
        %v2382 = vld [vmem:[#allocation5 + $0x120] sm:$0xff]
        %v2383 = vld [vmem:[#allocation5 + $0x128] sm:$0xff]
        %v2384 = vld [vmem:[#allocation5 + $0x130] sm:$0xff]
        %v2385 = vld [vmem:[#allocation5 + $0x138] sm:$0xff]
        %v2386 = vld [vmem:[#allocation5 + $0x140] sm:$0xff]
        %v2387 = vld [vmem:[#allocation5 + $0x148] sm:$0xff]
        %v2388 = vld [vmem:[#allocation5 + $0x150] sm:$0xff]
        %v2389 = vld [vmem:[#allocation5 + $0x158] sm:$0xff]
        %v2390 = vld [vmem:[#allocation5 + $0x160] sm:$0xff]
        %v2391 = vld [vmem:[#allocation5 + $0x168] sm:$0xff]
        %v2392 = vld [vmem:[#allocation5 + $0x170] sm:$0xff]
        %v2393 = vld [vmem:[#allocation5 + $0x178] sm:$0xff]
        %v2394 = vld [vmem:[#allocation5 + $0x180] sm:$0xff]
        %v2395 = vld [vmem:[#allocation5 + $0x188] sm:$0xff]
        %v2396 = vld [vmem:[#allocation5 + $0x190] sm:$0xff]
        %v2397 = vld [vmem:[#allocation5 + $0x198] sm:$0xff]
        %v2398 = vld [vmem:[#allocation5 + $0x1a0] sm:$0xff]
        %v2399 = vld [vmem:[#allocation5 + $0x1a8] sm:$0xff]
        %v2400 = vld [vmem:[#allocation5 + $0x1b0] sm:$0xff]
        %v2401 = vld [vmem:[#allocation5 + $0x1b8] sm:$0xff]
        %v2402 = vld [vmem:[#allocation5 + $0x1c0] sm:$0xff]
        %v2403 = vld [vmem:[#allocation5 + $0x1c8] sm:$0xff]
        %v2404 = vld [vmem:[#allocation5 + $0x1d0] sm:$0xff]
        %v2405 = vld [vmem:[#allocation5 + $0x1d8] sm:$0xff]
        %v2406 = vld [vmem:[#allocation5 + $0x1e0] sm:$0xff]
        %v2407 = vld [vmem:[#allocation5 + $0x1e8] sm:$0xff]
        %v2408 = vld [vmem:[#allocation5 + $0x1f0] sm:$0xff]
        %v2409 = vld [vmem:[#allocation5 + $0x1f8] sm:$0xff]
        %v2410 = vld [vmem:[%s6] sm:$0xff]
        %v2411 = vld [vmem:[%s6 + $0x8] sm:$0xff]
        %v2412 = vld [vmem:[%s6 + $0x10] sm:$0xff]
        %v2413 = vld [vmem:[%s6 + $0x18] sm:$0xff]
        %v2414 = vld [vmem:[%s6 + $0x20] sm:$0xff]
        %v2415 = vld [vmem:[%s6 + $0x28] sm:$0xff]
        %v2416 = vld [vmem:[%s6 + $0x30] sm:$0xff]
        %v2417 = vld [vmem:[%s6 + $0x38] sm:$0xff]
        %v2418 = vld [vmem:[%s6 + $0x40] sm:$0xff]
        %v2419 = vld [vmem:[%s6 + $0x48] sm:$0xff]
        %v2420 = vld [vmem:[%s6 + $0x50] sm:$0xff]
        %v2421 = vld [vmem:[%s6 + $0x58] sm:$0xff]
        %v2422 = vld [vmem:[%s6 + $0x60] sm:$0xff]
        %v2423 = vld [vmem:[%s6 + $0x68] sm:$0xff]
        %v2424 = vld [vmem:[%s6 + $0x70] sm:$0xff]
        %v2425 = vld [vmem:[%s6 + $0x78] sm:$0xff]
        %2427 = vset.pattern.permute.xlu0 0
        %2428 = vperm.xlu0 %2427, %v2410
        %v2429 = vpop.permute.xlu0 %2428
        %2432 = vset.pattern.permute.xlu0 0
        %2433 = vperm.xlu0 %2432, %v2411
        %v2434 = vpop.permute.xlu0 %2433
        %2437 = vset.pattern.permute.xlu0 0
        %2438 = vperm.xlu0 %2437, %v2412
        %v2439 = vpop.permute.xlu0 %2438
        %2442 = vset.pattern.permute.xlu0 0
        %2443 = vperm.xlu0 %2442, %v2413
        %v2444 = vpop.permute.xlu0 %2443
        %2447 = vset.pattern.permute.xlu0 0
        %2448 = vperm.xlu0 %2447, %v2414
        %v2449 = vpop.permute.xlu0 %2448
        %2452 = vset.pattern.permute.xlu0 0
        %2453 = vperm.xlu0 %2452, %v2415
        %v2454 = vpop.permute.xlu0 %2453
        %2457 = vset.pattern.permute.xlu0 0
        %2458 = vperm.xlu0 %2457, %v2416
        %v2459 = vpop.permute.xlu0 %2458
        %2462 = vset.pattern.permute.xlu0 0
        %2463 = vperm.xlu0 %2462, %v2417
        %v2464 = vpop.permute.xlu0 %2463
        %2467 = vset.pattern.permute.xlu0 0
        %2468 = vperm.xlu0 %2467, %v2418
        %v2469 = vpop.permute.xlu0 %2468
        %2472 = vset.pattern.permute.xlu0 0
        %2473 = vperm.xlu0 %2472, %v2419
        %v2474 = vpop.permute.xlu0 %2473
        %2477 = vset.pattern.permute.xlu0 0
        %2478 = vperm.xlu0 %2477, %v2420
        %v2479 = vpop.permute.xlu0 %2478
        %2482 = vset.pattern.permute.xlu0 0
        %2483 = vperm.xlu0 %2482, %v2421
        %v2484 = vpop.permute.xlu0 %2483
        %2487 = vset.pattern.permute.xlu0 0
        %2488 = vperm.xlu0 %2487, %v2422
        %v2489 = vpop.permute.xlu0 %2488
        %2492 = vset.pattern.permute.xlu0 0
        %2493 = vperm.xlu0 %2492, %v2423
        %v2494 = vpop.permute.xlu0 %2493
        %2497 = vset.pattern.permute.xlu0 0
        %2498 = vperm.xlu0 %2497, %v2424
        %v2499 = vpop.permute.xlu0 %2498
        %2502 = vset.pattern.permute.xlu0 0
        %2503 = vperm.xlu0 %2502, %v2425
        %v2504 = vpop.permute.xlu0 %2503
        %2506 = vmatprep.subr.mxu0 %v2249
        %2507 = vmatpush1.msra.mxu0 %v2248
        %2508 = vmatprep.subr.mxu0 %v2247
        %2509 = vmatpush1.msra.mxu0 %v2246
        %2510 = vmatprep.subr.mxu0 %v2245
        %2511 = vmatpush1.msra.mxu0 %v2244
        %2512 = vmatprep.subr.mxu0 %v2243
        %2513 = vmatpush1.msra.mxu0 %v2242
        %2514 = vmatprep.subr.mxu0 %v2241
        %2515 = vmatpush1.msra.mxu0 %v2240
        %2516 = vmatprep.subr.mxu0 %v2239
        %2517 = vmatpush1.msra.mxu0 %v2238
        %2518 = vmatprep.subr.mxu0 %v2237
        %2519 = vmatpush1.msra.mxu0 %v2236
        %2520 = vmatprep.subr.mxu0 %v2235
        %2521 = vmatpush1.msra.mxu0 %v2234
        %2522 = vmatprep.subr.mxu0 %v2233
        %2523 = vmatpush1.msra.mxu0 %v2232
        %2524 = vmatprep.subr.mxu0 %v2231
        %2525 = vmatpush1.msra.mxu0 %v2230
        %2526 = vmatprep.subr.mxu0 %v2229
        %2527 = vmatpush1.msra.mxu0 %v2228
        %2528 = vmatprep.subr.mxu0 %v2227
        %2529 = vmatpush1.msra.mxu0 %v2226
        %2530 = vmatprep.subr.mxu0 %v2225
        %2531 = vmatpush1.msra.mxu0 %v2224
        %2532 = vmatprep.subr.mxu0 %v2223
        %2533 = vmatpush1.msra.mxu0 %v2222
        %2534 = vmatprep.subr.mxu0 %v2221
        %2535 = vmatpush1.msra.mxu0 %v2220
        %2536 = vmatprep.subr.mxu0 %v2219
        %2537 = vmatpush1.msra.mxu0 %v2218
        %2538 = vmatprep.subr.mxu0 %v2281
        %2539 = vmatpush2.msra.mxu0 %v2280
        %2540 = vmatprep.subr.mxu0 %v2279
        %2541 = vmatpush2.msra.mxu0 %v2278
        %2542 = vmatprep.subr.mxu0 %v2277
        %2543 = vmatpush2.msra.mxu0 %v2276
        %2544 = vmatprep.subr.mxu0 %v2275
        %2545 = vmatpush2.msra.mxu0 %v2274
        %2546 = vmatprep.subr.mxu0 %v2273
        %2547 = vmatpush2.msra.mxu0 %v2272
        %2548 = vmatprep.subr.mxu0 %v2271
        %2549 = vmatpush2.msra.mxu0 %v2270
        %2550 = vmatprep.subr.mxu0 %v2269
        %2551 = vmatpush2.msra.mxu0 %v2268
        %2552 = vmatprep.subr.mxu0 %v2267
        %2553 = vmatpush2.msra.mxu0 %v2266
        %2554 = vmatprep.subr.mxu0 %v2265
        %2555 = vmatpush2.msra.mxu0 %v2264
        %2556 = vmatprep.subr.mxu0 %v2263
        %2557 = vmatpush2.msra.mxu0 %v2262
        %2558 = vmatprep.subr.mxu0 %v2261
        %2559 = vmatpush2.msra.mxu0 %v2260
        %2560 = vmatprep.subr.mxu0 %v2259
        %2561 = vmatpush2.msra.mxu0 %v2258
        %2562 = vmatprep.subr.mxu0 %v2257
        %2563 = vmatpush2.msra.mxu0 %v2256
        %2564 = vmatprep.subr.mxu0 %v2255
        %2565 = vmatpush2.msra.mxu0 %v2254
        %2566 = vmatprep.subr.mxu0 %v2253
        %2567 = vmatpush2.msra.mxu0 %v2252
        %2568 = vmatprep.subr.mxu0 %v2251
        %2569 = vmatpush2.msra.mxu0 %v2250
        %2570 = vmatprep.mubr.f32.mxu0 %v2347
        %2571 = vmatmul.mubr.f32.gmra.mxu0 %v2346
        %v2572 = vpop.f32.mrf.mxu0
        %v2573 = vadd.f32 %v2429, %v2572
        %v2574 = vpop.f32.mrf.mxu0
        %v2575 = vadd.f32 %v2429, %v2574
        %2576 = vmatprep.mubr.f32.mxu0 %v2351
        %2577 = vmatmul.mubr.f32.gmra.mxu0 %v2350
        %v2578 = vpop.f32.mrf.mxu0
        %v2579 = vadd.f32 %v2434, %v2578
        %v2580 = vpop.f32.mrf.mxu0
        %v2581 = vadd.f32 %v2434, %v2580
        %2582 = vmatprep.mubr.f32.mxu0 %v2355
        %2583 = vmatmul.mubr.f32.gmra.mxu0 %v2354
        %v2584 = vpop.f32.mrf.mxu0
        %v2585 = vadd.f32 %v2439, %v2584
        %v2586 = vpop.f32.mrf.mxu0
        %v2587 = vadd.f32 %v2439, %v2586
        %2588 = vmatprep.mubr.f32.mxu0 %v2359
        %2589 = vmatmul.mubr.f32.gmra.mxu0 %v2358
        %v2590 = vpop.f32.mrf.mxu0
        %v2591 = vadd.f32 %v2444, %v2590
        %v2592 = vpop.f32.mrf.mxu0
        %v2593 = vadd.f32 %v2444, %v2592
        %2594 = vmatprep.mubr.f32.mxu0 %v2363
        %2595 = vmatmul.mubr.f32.gmra.mxu0 %v2362
        %v2596 = vpop.f32.mrf.mxu0
        %v2597 = vadd.f32 %v2449, %v2596
        %v2598 = vpop.f32.mrf.mxu0
        %v2599 = vadd.f32 %v2449, %v2598
        %2600 = vmatprep.mubr.f32.mxu0 %v2367
        %2601 = vmatmul.mubr.f32.gmra.mxu0 %v2366
        %v2602 = vpop.f32.mrf.mxu0
        %v2603 = vadd.f32 %v2454, %v2602
        %v2604 = vpop.f32.mrf.mxu0
        %v2605 = vadd.f32 %v2454, %v2604
        %2606 = vmatprep.mubr.f32.mxu0 %v2371
        %2607 = vmatmul.mubr.f32.gmra.mxu0 %v2370
        %v2608 = vpop.f32.mrf.mxu0
        %v2609 = vadd.f32 %v2459, %v2608
        %v2610 = vpop.f32.mrf.mxu0
        %v2611 = vadd.f32 %v2459, %v2610
        %2612 = vmatprep.mubr.f32.mxu0 %v2375
        %2613 = vmatmul.mubr.f32.gmra.mxu0 %v2374
        %v2614 = vpop.f32.mrf.mxu0
        %v2615 = vadd.f32 %v2464, %v2614
        %v2616 = vpop.f32.mrf.mxu0
        %v2617 = vadd.f32 %v2464, %v2616
        %2618 = vmatprep.mubr.f32.mxu0 %v2379
        %2619 = vmatmul.mubr.f32.gmra.mxu0 %v2378
        %v2620 = vpop.f32.mrf.mxu0
        %v2621 = vadd.f32 %v2469, %v2620
        %v2622 = vpop.f32.mrf.mxu0
        %v2623 = vadd.f32 %v2469, %v2622
        %2624 = vmatprep.mubr.f32.mxu0 %v2383
        %2625 = vmatmul.mubr.f32.gmra.mxu0 %v2382
        %v2626 = vpop.f32.mrf.mxu0
        %v2627 = vadd.f32 %v2474, %v2626
        %v2628 = vpop.f32.mrf.mxu0
        %v2629 = vadd.f32 %v2474, %v2628
        %2630 = vmatprep.mubr.f32.mxu0 %v2387
        %2631 = vmatmul.mubr.f32.gmra.mxu0 %v2386
        %v2632 = vpop.f32.mrf.mxu0
        %v2633 = vadd.f32 %v2479, %v2632
        %v2634 = vpop.f32.mrf.mxu0
        %v2635 = vadd.f32 %v2479, %v2634
        %2636 = vmatprep.mubr.f32.mxu0 %v2391
        %2637 = vmatmul.mubr.f32.gmra.mxu0 %v2390
        %v2638 = vpop.f32.mrf.mxu0
        %v2639 = vadd.f32 %v2484, %v2638
        %v2640 = vpop.f32.mrf.mxu0
        %v2641 = vadd.f32 %v2484, %v2640
        %2642 = vmatprep.mubr.f32.mxu0 %v2395
        %2643 = vmatmul.mubr.f32.gmra.mxu0 %v2394
        %v2644 = vpop.f32.mrf.mxu0
        %v2645 = vadd.f32 %v2489, %v2644
        %v2646 = vpop.f32.mrf.mxu0
        %v2647 = vadd.f32 %v2489, %v2646
        %2648 = vmatprep.mubr.f32.mxu0 %v2399
        %2649 = vmatmul.mubr.f32.gmra.mxu0 %v2398
        %v2650 = vpop.f32.mrf.mxu0
        %v2651 = vadd.f32 %v2494, %v2650
        %v2652 = vpop.f32.mrf.mxu0
        %v2653 = vadd.f32 %v2494, %v2652
        %2654 = vmatprep.mubr.f32.mxu0 %v2403
        %2655 = vmatmul.mubr.f32.gmra.mxu0 %v2402
        %v2656 = vpop.f32.mrf.mxu0
        %v2657 = vadd.f32 %v2499, %v2656
        %v2658 = vpop.f32.mrf.mxu0
        %v2659 = vadd.f32 %v2499, %v2658
        %2660 = vmatprep.mubr.f32.mxu0 %v2407
        %2661 = vmatmul.mubr.f32.gmra.mxu0 %v2406
        %v2662 = vpop.f32.mrf.mxu0
        %v2663 = vadd.f32 %v2504, %v2662
        %v2664 = vpop.f32.mrf.mxu0
        %v2665 = vadd.f32 %v2504, %v2664
        %2666 = vdwg.mxu0
        %2667 = vmatprep.subr.mxu0 %v2313
        %2668 = vmatpush1.msra.mxu0 %v2312
        %2669 = vmatprep.subr.mxu0 %v2311
        %2670 = vmatpush1.msra.mxu0 %v2310
        %2671 = vmatprep.subr.mxu0 %v2309
        %2672 = vmatpush1.msra.mxu0 %v2308
        %2673 = vmatprep.subr.mxu0 %v2307
        %2674 = vmatpush1.msra.mxu0 %v2306
        %2675 = vmatprep.subr.mxu0 %v2305
        %2676 = vmatpush1.msra.mxu0 %v2304
        %2677 = vmatprep.subr.mxu0 %v2303
        %2678 = vmatpush1.msra.mxu0 %v2302
        %2679 = vmatprep.subr.mxu0 %v2301
        %2680 = vmatpush1.msra.mxu0 %v2300
        %2681 = vmatprep.subr.mxu0 %v2299
        %2682 = vmatpush1.msra.mxu0 %v2298
        %2683 = vmatprep.subr.mxu0 %v2297
        %2684 = vmatpush1.msra.mxu0 %v2296
        %2685 = vmatprep.subr.mxu0 %v2295
        %2686 = vmatpush1.msra.mxu0 %v2294
        %2687 = vmatprep.subr.mxu0 %v2293
        %2688 = vmatpush1.msra.mxu0 %v2292
        %2689 = vmatprep.subr.mxu0 %v2291
        %2690 = vmatpush1.msra.mxu0 %v2290
        %2691 = vmatprep.subr.mxu0 %v2289
        %2692 = vmatpush1.msra.mxu0 %v2288
        %2693 = vmatprep.subr.mxu0 %v2287
        %2694 = vmatpush1.msra.mxu0 %v2286
        %2695 = vmatprep.subr.mxu0 %v2285
        %2696 = vmatpush1.msra.mxu0 %v2284
        %2697 = vmatprep.subr.mxu0 %v2283
        %2698 = vmatpush1.msra.mxu0 %v2282
        %2699 = vmatprep.subr.mxu0 %v2345
        %2700 = vmatpush2.msra.mxu0 %v2344
        %2701 = vmatprep.subr.mxu0 %v2343
        %2702 = vmatpush2.msra.mxu0 %v2342
        %2703 = vmatprep.subr.mxu0 %v2341
        %2704 = vmatpush2.msra.mxu0 %v2340
        %2705 = vmatprep.subr.mxu0 %v2339
        %2706 = vmatpush2.msra.mxu0 %v2338
        %2707 = vmatprep.subr.mxu0 %v2337
        %2708 = vmatpush2.msra.mxu0 %v2336
        %2709 = vmatprep.subr.mxu0 %v2335
        %2710 = vmatpush2.msra.mxu0 %v2334
        %2711 = vmatprep.subr.mxu0 %v2333
        %2712 = vmatpush2.msra.mxu0 %v2332
        %2713 = vmatprep.subr.mxu0 %v2331
        %2714 = vmatpush2.msra.mxu0 %v2330
        %2715 = vmatprep.subr.mxu0 %v2329
        %2716 = vmatpush2.msra.mxu0 %v2328
        %2717 = vmatprep.subr.mxu0 %v2327
        %2718 = vmatpush2.msra.mxu0 %v2326
        %2719 = vmatprep.subr.mxu0 %v2325
        %2720 = vmatpush2.msra.mxu0 %v2324
        %2721 = vmatprep.subr.mxu0 %v2323
        %2722 = vmatpush2.msra.mxu0 %v2322
        %2723 = vmatprep.subr.mxu0 %v2321
        %2724 = vmatpush2.msra.mxu0 %v2320
        %2725 = vmatprep.subr.mxu0 %v2319
        %2726 = vmatpush2.msra.mxu0 %v2318
        %2727 = vmatprep.subr.mxu0 %v2317
        %2728 = vmatpush2.msra.mxu0 %v2316
        %2729 = vmatprep.subr.mxu0 %v2315
        %2730 = vmatpush2.msra.mxu0 %v2314
        %2731 = vmatprep.mubr.f32.mxu0 %v2349
        %2732 = vmatmul.mubr.f32.gmra.mxu0 %v2348
        %v2733 = vpop.f32.mrf.mxu0
        %v2734 = vadd.f32 %v2573, %v2733
        %v2735 = vpop.f32.mrf.mxu0
        %v2736 = vadd.f32 %v2575, %v2735
        %2737 = vmatprep.mubr.f32.mxu0 %v2353
        %2738 = vmatmul.mubr.f32.gmra.mxu0 %v2352
        %v2739 = vpop.f32.mrf.mxu0
        %v2740 = vadd.f32 %v2579, %v2739
        %v2741 = vpop.f32.mrf.mxu0
        %v2742 = vadd.f32 %v2581, %v2741
        %2743 = vmatprep.mubr.f32.mxu0 %v2357
        %2744 = vmatmul.mubr.f32.gmra.mxu0 %v2356
        %v2745 = vpop.f32.mrf.mxu0
        %v2746 = vadd.f32 %v2585, %v2745
        %v2747 = vpop.f32.mrf.mxu0
        %v2748 = vadd.f32 %v2587, %v2747
        %2749 = vmatprep.mubr.f32.mxu0 %v2361
        %2750 = vmatmul.mubr.f32.gmra.mxu0 %v2360
        %v2751 = vpop.f32.mrf.mxu0
        %v2752 = vadd.f32 %v2591, %v2751
        %v2753 = vpop.f32.mrf.mxu0
        %v2754 = vadd.f32 %v2593, %v2753
        %2755 = vmatprep.mubr.f32.mxu0 %v2365
        %2756 = vmatmul.mubr.f32.gmra.mxu0 %v2364
        %v2757 = vpop.f32.mrf.mxu0
        %v2758 = vadd.f32 %v2597, %v2757
        %v2759 = vpop.f32.mrf.mxu0
        %v2760 = vadd.f32 %v2599, %v2759
        %2761 = vmatprep.mubr.f32.mxu0 %v2369
        %2762 = vmatmul.mubr.f32.gmra.mxu0 %v2368
        %v2763 = vpop.f32.mrf.mxu0
        %v2764 = vadd.f32 %v2603, %v2763
        %v2765 = vpop.f32.mrf.mxu0
        %v2766 = vadd.f32 %v2605, %v2765
        %2767 = vmatprep.mubr.f32.mxu0 %v2373
        %2768 = vmatmul.mubr.f32.gmra.mxu0 %v2372
        %v2769 = vpop.f32.mrf.mxu0
        %v2770 = vadd.f32 %v2609, %v2769
        %v2771 = vpop.f32.mrf.mxu0
        %v2772 = vadd.f32 %v2611, %v2771
        %2773 = vmatprep.mubr.f32.mxu0 %v2377
        %2774 = vmatmul.mubr.f32.gmra.mxu0 %v2376
        %v2775 = vpop.f32.mrf.mxu0
        %v2776 = vadd.f32 %v2615, %v2775
        %v2777 = vpop.f32.mrf.mxu0
        %v2778 = vadd.f32 %v2617, %v2777
        %2779 = vmatprep.mubr.f32.mxu0 %v2381
        %2780 = vmatmul.mubr.f32.gmra.mxu0 %v2380
        %v2781 = vpop.f32.mrf.mxu0
        %v2782 = vadd.f32 %v2621, %v2781
        %v2783 = vpop.f32.mrf.mxu0
        %v2784 = vadd.f32 %v2623, %v2783
        %2785 = vmatprep.mubr.f32.mxu0 %v2385
        %2786 = vmatmul.mubr.f32.gmra.mxu0 %v2384
        %v2787 = vpop.f32.mrf.mxu0
        %v2788 = vadd.f32 %v2627, %v2787
        %v2789 = vpop.f32.mrf.mxu0
        %v2790 = vadd.f32 %v2629, %v2789
        %2791 = vmatprep.mubr.f32.mxu0 %v2389
        %2792 = vmatmul.mubr.f32.gmra.mxu0 %v2388
        %v2793 = vpop.f32.mrf.mxu0
        %v2794 = vadd.f32 %v2633, %v2793
        %v2795 = vpop.f32.mrf.mxu0
        %v2796 = vadd.f32 %v2635, %v2795
        %2797 = vmatprep.mubr.f32.mxu0 %v2393
        %2798 = vmatmul.mubr.f32.gmra.mxu0 %v2392
        %v2799 = vpop.f32.mrf.mxu0
        %v2800 = vadd.f32 %v2639, %v2799
        %v2801 = vpop.f32.mrf.mxu0
        %v2802 = vadd.f32 %v2641, %v2801
        %2803 = vmatprep.mubr.f32.mxu0 %v2397
        %2804 = vmatmul.mubr.f32.gmra.mxu0 %v2396
        %v2805 = vpop.f32.mrf.mxu0
        %v2806 = vadd.f32 %v2645, %v2805
        %v2807 = vpop.f32.mrf.mxu0
        %v2808 = vadd.f32 %v2647, %v2807
        %2809 = vmatprep.mubr.f32.mxu0 %v2401
        %2810 = vmatmul.mubr.f32.gmra.mxu0 %v2400
        %v2811 = vpop.f32.mrf.mxu0
        %v2812 = vadd.f32 %v2651, %v2811
        %v2813 = vpop.f32.mrf.mxu0
        %v2814 = vadd.f32 %v2653, %v2813
        %2815 = vmatprep.mubr.f32.mxu0 %v2405
        %2816 = vmatmul.mubr.f32.gmra.mxu0 %v2404
        %v2817 = vpop.f32.mrf.mxu0
        %v2818 = vadd.f32 %v2657, %v2817
        %v2819 = vpop.f32.mrf.mxu0
        %v2820 = vadd.f32 %v2659, %v2819
        %2821 = vmatprep.mubr.f32.mxu0 %v2409
        %2822 = vmatmul.mubr.f32.gmra.mxu0 %v2408
        %v2823 = vpop.f32.mrf.mxu0
        %v2824 = vadd.f32 %v2663, %v2823
        %v2825 = vpop.f32.mrf.mxu0
        %v2826 = vadd.f32 %v2665, %v2825
        %2827 = vdwg.mxu0
        %2828 = vst [vmem:[%s329] sm:$0xff] %v2734
        %2829 = vst [vmem:[%s329 + $0x8] sm:$0xff] %v2736
        %2830 = vst [vmem:[%s329 + $0x10] sm:$0xff] %v2740
        %2831 = vst [vmem:[%s329 + $0x18] sm:$0xff] %v2742
        %2832 = vst [vmem:[%s329 + $0x20] sm:$0xff] %v2746
        %2833 = vst [vmem:[%s329 + $0x28] sm:$0xff] %v2748
        %2834 = vst [vmem:[%s329 + $0x30] sm:$0xff] %v2752
        %2835 = vst [vmem:[%s329 + $0x38] sm:$0xff] %v2754
        %2836 = vst [vmem:[%s329 + $0x40] sm:$0xff] %v2758
        %2837 = vst [vmem:[%s329 + $0x48] sm:$0xff] %v2760
        %2838 = vst [vmem:[%s329 + $0x50] sm:$0xff] %v2764
        %2839 = vst [vmem:[%s329 + $0x58] sm:$0xff] %v2766
        %2840 = vst [vmem:[%s329 + $0x60] sm:$0xff] %v2770
        %2841 = vst [vmem:[%s329 + $0x68] sm:$0xff] %v2772
        %2842 = vst [vmem:[%s329 + $0x70] sm:$0xff] %v2776
        %2843 = vst [vmem:[%s329 + $0x78] sm:$0xff] %v2778
        %2844 = vst [vmem:[%s329 + $0x80] sm:$0xff] %v2782
        %2845 = vst [vmem:[%s329 + $0x88] sm:$0xff] %v2784
        %2846 = vst [vmem:[%s329 + $0x90] sm:$0xff] %v2788
        %2847 = vst [vmem:[%s329 + $0x98] sm:$0xff] %v2790
        %2848 = vst [vmem:[%s329 + $0xa0] sm:$0xff] %v2794
        %2849 = vst [vmem:[%s329 + $0xa8] sm:$0xff] %v2796
        %2850 = vst [vmem:[%s329 + $0xb0] sm:$0xff] %v2800
        %2851 = vst [vmem:[%s329 + $0xb8] sm:$0xff] %v2802
        %2852 = vst [vmem:[%s329 + $0xc0] sm:$0xff] %v2806
        %2853 = vst [vmem:[%s329 + $0xc8] sm:$0xff] %v2808
        %2854 = vst [vmem:[%s329 + $0xd0] sm:$0xff] %v2812
        %2855 = vst [vmem:[%s329 + $0xd8] sm:$0xff] %v2814
        %2856 = vst [vmem:[%s329 + $0xe0] sm:$0xff] %v2818
        %2857 = vst [vmem:[%s329 + $0xe8] sm:$0xff] %v2820
        %2858 = vst [vmem:[%s329 + $0xf0] sm:$0xff] %v2824
        %2859 = vst [vmem:[%s329 + $0xf8] sm:$0xff] %v2826
        %s2860 = sand.u32 %s201, 1
        %s2861 = scalar_lea.sflag [#allocation4], %s2860
        %s2862 = sand.u32 %s201, 1
        %s2863 = smul.addr %s2862, 256
        %s2864 = scalar_lea.vmem [#allocation7], %s2863
        // Predicated region
        $region57: #{tpu_custom_call.1} parent=47 // pred_check
          %p2865 = pneg %p211
        $region58: #{tpu_custom_call.1} parent=47 // pred_check_branch
          %2867 = sbr.rel (%p2865) target = $region60
        $region59: #{tpu_custom_call.1} parent=47 // pred_region
          %s2868 = smul.u32 2, %s30
          %s2870 = ssub.s32 4096, 4096
          %2871 = vsyncadd %s2861, %s2870
          %s2872 = smul.addr %s29, 64
          %s2873 = sadd.s32 %s2868, %s2872
          %s2874 = smul.addr %s2873, 128
          %s2875 = scalar_lea.hbm %s7, %s2874
          %s2876 = sshll.u32 %s2864, 4
          %s2877 = int_to_ptr.vmem [resolvable:$true] %s2876
          %2882 = dma.vmem_to_hbm [thread:$0]  %s2877, 4096, %s2875, %s2861, 256, 512, 16
        $region60: #{tpu_custom_call.1} parent=47 // pred_fallthru
          _
      $region48: #{tpu_custom_call.1} parent=5 // pred_fallthru
        _
      %p2883 = scmp.le.s32.totalorder 2, %s20
      // Predicated region
      $region61: #{tpu_custom_call.1} parent=5 // pred_check
        %p2884 = pneg %p2883
      $region62: #{tpu_custom_call.1} parent=5 // pred_check_branch
        %2886 = sbr.rel (%p2884) target = $region64
      $region63: #{tpu_custom_call.1} parent=5 // pred_region
        %s2887 = ssub.s32 %s20, 2
        // Predicated region
        $region65: #{tpu_custom_call.1} parent=63 // pred_check
          %p2888 = pneg %p217
        $region66: #{tpu_custom_call.1} parent=63 // pred_check_branch
          %2890 = sbr.rel (%p2888) target = $region68
        $region67: #{tpu_custom_call.1} parent=63 // pred_region
          %s2891 = sand.u32 %s202, 1
          %s2892 = scalar_lea.sflag [#allocation4], %s2891
          %s2893 = sand.u32 %s202, 1
          %s2894 = smul.addr %s2893, 256
          %s2895 = scalar_lea.vmem [#allocation7], %s2894
          %2896 = dma.done %s2892, 4096
        $region68: #{tpu_custom_call.1} parent=63 // pred_fallthru
          _
      $region64: #{tpu_custom_call.1} parent=5 // pred_fallthru
        _
    $region6: #{tpu_custom_call.1} parent=1 // loop_footer
      %s24 = sadd.s32 1, %s20
    $region7: #{tpu_custom_call.1} parent=1 // loop_footer_branch
      %19 = sbr.rel target = $region3
    $region8: #{tpu_custom_call.1} parent=1 // loop_exit
      _
    %2897 = vsyncpa [#allocation3], 1
    %s2898 = scalar_lea.sflag [#allocation3], 1
    %2899 = vsyncpa %s2898, 1
    %2900 = vsyncpa [#allocation6], 1
    %2901 = vsyncpa [#allocation4], 1
    %s2902 = scalar_lea.sflag [#allocation4], 1
    %2903 = vsyncpa %s2902, 1

</llo_original>
